<compile_context>
chip_gen: v7x
topology: tpu7x:2x2x1
jax: 0.10.0
libtpu: 0.0.40
codegen_flags: <defaults>
</compile_context>

<pallas_src>
import math
import functools

import jax
import jax.numpy as jnp
from jax import lax
from jax.experimental import pallas as pl
from jax.experimental.pallas import tpu as pltpu


# --------------------------- hardware-aware config ---------------------------

def _vmem_capacity_bytes():
    try:
        return int(pltpu.get_tpu_info().vmem_capacity_bytes)
    except Exception:
        return 64 * 1024 * 1024          # conservative fallback (v7x-sized)


_VMEM_CAP = _vmem_capacity_bytes()
_BIG_VMEM = _VMEM_CAP >= (96 << 20)      # v5e/v6e (128 MiB) vs v7x (64 MiB)
_VMEM_LIMIT = min(int(_VMEM_CAP * 3 // 4), 96 << 20)
_ROW_CAP = 1024 if _BIG_VMEM else 256    # row (sublane) tile cap for projections
_LANE_CAP = 1024 if _BIG_VMEM else 512   # lane (contraction) tile cap
_ATTN_CAP = 512 if _BIG_VMEM else 256    # tq / tkv cap for flash attention


def _pick_sub_tile(dim, cap):
    """Largest multiple-of-8 divisor of dim that is <= cap; else the full dim."""
    t = (min(cap, dim) // 8) * 8
    while t >= 8:
        if dim % t == 0:
            return t
        t -= 8
    return dim


def _pick_lane_tile(dim, cap):
    """Largest multiple-of-128 divisor of dim that is <= cap; else the full dim."""
    t = (min(cap, dim) // 128) * 128
    while t >= 128:
        if dim % t == 0:
            return t
        t -= 128
    return dim


# ------------------- fused c_attn matmul + RoPE + bf16 qkv --------------------
#
# grid = (B, T/tt, E/tk); output tile is the full 3E width so the RoPE epilogue
# can rotate within each head using two full-width lane rolls and an iota mask
# (no slice+concat per head, no separate rope kernel, no f32 qkv in HBM).
# rotate_half(x)[c] = -x[c+half]  for c in the first half of a head
#                    =  x[c-half]  for c in the second half
# The q/k segments both use the same (T,E) cos/sin tables (the 1/sqrt(Dh) scale
# is folded into the q columns of the weight); v passes through untouched.

def _qkv_rope_kernel(x_ref, w_ref, cos_ref, sin_ref, o_ref, acc_ref,
                     *, embed_dim, head_dim):
    k_idx = pl.program_id(2)

    @pl.when(k_idx == 0)
    def _():
        acc_ref[...] = jnp.zeros_like(acc_ref)

    acc_ref[...] += jnp.dot(
        x_ref[0].astype(jnp.bfloat16), w_ref[...],
        preferred_element_type=jnp.float32,
    )

    @pl.when(k_idx == pl.num_programs(2) - 1)
    def _():
        e = embed_dim
        half = head_dim // 2
        y = acc_ref[...]                       # (tt, 3E) f32
        qk = y[:, : 2 * e]                     # q and k columns (rope applies)
        v = y[:, 2 * e:]                       # v columns (identity)

        cos = cos_ref[...]                     # (tt, E) f32 (fp16-rounded values)
        sin = sin_ref[...]
        cos2 = jnp.concatenate([cos, cos], axis=1)     # (tt, 2E)
        sin2 = jnp.concatenate([sin, sin], axis=1)

        n = 2 * e
        x_plus = pltpu.roll(qk, shift=n - half, axis=1)    # x_plus[c]  = qk[c + half]
        x_minus = pltpu.roll(qk, shift=half, axis=1)       # x_minus[c] = qk[c - half]
        lane = lax.broadcasted_iota(jnp.int32, qk.shape, 1)
        first_half = (lane % head_dim) < half
        rot = jnp.where(first_half, -x_plus, x_minus)      # rotate-half within each head

        qk_rot = cos2 * qk + sin2 * rot
        o_ref[0] = jnp.concatenate([qk_rot, v], axis=1).astype(o_ref.dtype)


def qkv_rope_proj(x, w_cattn_t, cos_e, sin_e, head_dim):
    """x (B,T,E) f32, w_cattn_t (E,3E) bf16 (scale folded into q columns),
    cos_e/sin_e (T,E) f32 -> qkv (B,T,3E) bf16 with RoPE applied to q,k."""
    B, T, E = x.shape
    three_e = w_cattn_t.shape[1]
    assert three_e == 3 * E
    assert E % head_dim == 0 and head_dim % 2 == 0

    tt = _pick_sub_tile(T, _ROW_CAP)
    tk = _pick_lane_tile(E, _LANE_CAP)
    grid = (B, T // tt, E // tk)
    kern = functools.partial(_qkv_rope_kernel, embed_dim=E, head_dim=head_dim)

    return pl.pallas_call(
        kern,
        out_shape=jax.ShapeDtypeStruct((B, T, three_e), jnp.bfloat16),
        grid=grid,
        in_specs=[
            pl.BlockSpec((1, tt, tk), lambda b, t, k: (b, t, k)),
            pl.BlockSpec((tk, three_e), lambda b, t, k: (k, 0)),
            pl.BlockSpec((tt, E), lambda b, t, k: (t, 0)),
            pl.BlockSpec((tt, E), lambda b, t, k: (t, 0)),
        ],
        out_specs=pl.BlockSpec((1, tt, three_e), lambda b, t, k: (b, t, 0)),
        scratch_shapes=[pltpu.VMEM((tt, three_e), jnp.float32)],
        compiler_params=pltpu.CompilerParams(
            dimension_semantics=("parallel", "parallel", "arbitrary"),
            vmem_limit_bytes=_VMEM_LIMIT,
        ),
    )(x, w_cattn_t, cos_e, sin_e)


def _rope_tables(seq_len, num_heads, head_dim, base=10000.0):
    """(T, E) cos / sin tables (values rounded through fp16 like RotaryEmbeddings)."""
    theta = jnp.power(base, -jnp.arange(0, head_dim, 2, dtype=jnp.float32) / head_dim)
    pos = jnp.arange(seq_len, dtype=jnp.float32)[:, None]
    m_theta = pos * theta[None, :]
    m_theta = jnp.concatenate([m_theta, m_theta], axis=-1)              # (T, Dh)
    cos = jnp.cos(m_theta).astype(jnp.float16).astype(jnp.float32)
    sin = jnp.sin(m_theta).astype(jnp.float16).astype(jnp.float32)
    return jnp.tile(cos, (1, num_heads)), jnp.tile(sin, (1, num_heads))  # (T, E)


# --------------------- flash attention on packed (B,T,E) ---------------------
#
# Online softmax with vectorized per-head bookkeeping: scores form one
# (H, tq, tkv) slab, m/l are (H, tq) with single full stores, acc is head-major
# (H, tq, Dh) and rescaled/updated with one store per kv step. The per-head
# MXU pushes remain (the MXU only does 2-D matmuls; Dh-deep contraction is
# inherent to this layout), but all the masked per-head column writes are gone.

def _flash_attn_kernel(q_ref, k_ref, v_ref, o_ref, m_ref, l_ref, acc_ref,
                       *, num_heads, head_dim):
    kv_idx = pl.program_id(2)

    @pl.when(kv_idx == 0)
    def _():
        m_ref[...] = jnp.full_like(m_ref, -jnp.inf)
        l_ref[...] = jnp.zeros_like(l_ref)
        acc_ref[...] = jnp.zeros_like(acc_ref)

    q = q_ref[0]   # (tq,  E) bf16  (RoPE + scale already applied)
    k = k_ref[0]   # (tkv, E) bf16
    v = v_ref[0]   # (tkv, E) bf16
    H, Dh = num_heads, head_dim

    # per-head QK^T, stacked once into a (H, tq, tkv) f32 slab
    s = jnp.stack(
        [lax.dot_general(q[:, h * Dh:(h + 1) * Dh], k[:, h * Dh:(h + 1) * Dh],
                         (((1,), (1,)), ((), ())),
                         preferred_element_type=jnp.float32)
         for h in range(H)], axis=0)

    m_prev = m_ref[...]                                        # (H, tq)
    m_new = jnp.maximum(m_prev, jnp.max(s, axis=-1))           # (H, tq)
    alpha = jnp.exp(m_prev - m_new)                            # (H, tq)
    p = jnp.exp(s - m_new[:, :, None])                         # (H, tq, tkv) f32

    l_ref[...] = alpha * l_ref[...] + jnp.sum(p, axis=-1)
    m_ref[...] = m_new

    pv = jnp.stack(
        [jnp.dot(p[h].astype(v.dtype), v[:, h * Dh:(h + 1) * Dh],
                 preferred_element_type=jnp.float32)
         for h in range(H)], axis=0)                           # (H, tq, Dh)
    acc_ref[...] = alpha[:, :, None] * acc_ref[...] + pv

    @pl.when(kv_idx == pl.num_programs(2) - 1)
    def _():
        inv_l = pl.reciprocal(l_ref[...], approx=True)         # (H, tq)
        out = acc_ref[...] * inv_l[:, :, None]                 # (H, tq, Dh)
        o_ref[0] = jnp.concatenate([out[h] for h in range(H)],
                                   axis=-1).astype(o_ref.dtype)


def flash_attention(qkv, num_heads, head_dim):
    """qkv (B, T, 3E) bf16 -> attention output (B, T, E) bf16 (lane-dense)."""
    B, T, three_e = qkv.shape
    E = num_heads * head_dim
    assert three_e == 3 * E

    tq = _pick_sub_tile(T, _ATTN_CAP)
    tkv = _pick_sub_tile(T, _ATTN_CAP)
    grid = (B, T // tq, T // tkv)
    kern = functools.partial(_flash_attn_kernel, num_heads=num_heads, head_dim=head_dim)

    if E % 128 == 0:
        # column blocks 0/1/2 of the same packed array -> no extra HBM copies
        in_specs = [
            pl.BlockSpec((1, tq, E), lambda b, qi, ki: (b, qi, 0)),
            pl.BlockSpec((1, tkv, E), lambda b, qi, ki: (b, ki, 1)),
            pl.BlockSpec((1, tkv, E), lambda b, qi, ki: (b, ki, 2)),
        ]
        args = (qkv, qkv, qkv)
    else:
        # TODO(synk): non-128-aligned E pays an extra split copy here
        q, k, v = jnp.split(qkv, 3, axis=-1)
        in_specs = [
            pl.BlockSpec((1, tq, E), lambda b, qi, ki: (b, qi, 0)),
            pl.BlockSpec((1, tkv, E), lambda b, qi, ki: (b, ki, 0)),
            pl.BlockSpec((1, tkv, E), lambda b, qi, ki: (b, ki, 0)),
        ]
        args = (q, k, v)

    return pl.pallas_call(
        kern,
        out_shape=jax.ShapeDtypeStruct((B, T, E), jnp.bfloat16),
        grid=grid,
        in_specs=in_specs,
        out_specs=pl.BlockSpec((1, tq, E), lambda b, qi, ki: (b, qi, 0)),
        scratch_shapes=[
            pltpu.VMEM((num_heads, tq), jnp.float32),            # running max m
            pltpu.VMEM((num_heads, tq), jnp.float32),            # running sum l
            pltpu.VMEM((num_heads, tq, head_dim), jnp.float32),  # output accumulator
        ],
        compiler_params=pltpu.CompilerParams(
            dimension_semantics=("parallel", "parallel", "arbitrary"),
            vmem_limit_bytes=_VMEM_LIMIT,
        ),
    )(*args)


# ------------------------------ output projection -----------------------------

def _matmul_kernel(x_ref, w_ref, o_ref, acc_ref):
    @pl.when(pl.program_id(2) == 0)
    def _():
        acc_ref[...] = jnp.zeros_like(acc_ref)

    acc_ref[...] += jnp.dot(
        x_ref[...].astype(jnp.bfloat16),
        w_ref[...].astype(jnp.bfloat16),
        preferred_element_type=jnp.float32,
    )

    @pl.when(pl.program_id(2) == pl.num_programs(2) - 1)
    def _():
        o_ref[...] = acc_ref[...].astype(o_ref.dtype)


def pallas_linear(x, w, out_dtype):
    """y = x @ w.  w is (K, N), already pre-transposed and pre-cast to bf16."""
    M, K = x.shape
    K2, N = w.shape
    assert K == K2
    tm = _pick_sub_tile(M, _ROW_CAP)
    tn = _pick_lane_tile(N, _LANE_CAP)
    tk = _pick_lane_tile(K, _LANE_CAP)
    grid = (M // tm, N // tn, K // tk)
    return pl.pallas_call(
        _matmul_kernel,
        out_shape=jax.ShapeDtypeStruct((M, N), out_dtype),
        grid=grid,
        in_specs=[
            pl.BlockSpec((tm, tk), lambda i, j, k: (i, k)),
            pl.BlockSpec((tk, tn), lambda i, j, k: (k, j)),
        ],
        out_specs=pl.BlockSpec((tm, tn), lambda i, j, k: (i, j)),
        scratch_shapes=[pltpu.VMEM((tm, tn), jnp.float32)],
        compiler_params=pltpu.CompilerParams(
            dimension_semantics=("parallel", "parallel", "arbitrary"),
            vmem_limit_bytes=_VMEM_LIMIT,
        ),
    )(x, w)


# ------------------------------ forward pass ---------------------------------

@functools.partial(jax.jit, static_argnames=("num_heads",))
def causal_self_attention_forward(query, w_cattn_fused, w_out_t, *, num_heads):
    """query: (T, B, E) f32.
    w_cattn_fused: (E, 3E) bf16, pre-transposed, 1/sqrt(Dh) folded into q columns.
    w_out_t: (E, E) bf16, pre-transposed.  Returns (T, B, E) f32."""
    T, B, E = query.shape
    H = num_heads
    assert E % H == 0, "embed_dim must be divisible by num_heads"
    Dh = E // H
    assert Dh % 2 == 0, "rotary width must be even"

    # batch-major token rows so every kernel is lane-dense
    x = query.transpose(1, 0, 2)                                  # (B, T, E)

    cos_e, sin_e = _rope_tables(T, H, Dh)                         # (T, E) each
    qkv = qkv_rope_proj(x, w_cattn_fused, cos_e, sin_e, Dh)       # (B, T, 3E) bf16

    attn = flash_attention(qkv, H, Dh)                            # (B, T, E) bf16

    out = pallas_linear(attn.reshape(B * T, E), w_out_t, jnp.float32)   # out_proj
    return out.reshape(B, T, E).transpose(1, 0, 2)                # back to (T, B, E)


# ------------------------------ pure-JAX reference ---------------------------

def reference_forward(query, w_cattn, w_out, num_heads):
    T, B, E = query.shape
    H = num_heads
    Dh = E // H
    qkv = query.reshape(T * B, E) @ w_cattn.T
    qkv = qkv.reshape(T, B, 3 * E)
    q, k, v = jnp.split(qkv, 3, axis=2)
    to_heads = lambda t: t.reshape(T, B * H, Dh).transpose(1, 0, 2)
    qh, kh, vh = to_heads(q), to_heads(k), to_heads(v)

    theta = jnp.power(10000.0, -jnp.arange(0, Dh, 2, dtype=jnp.float32) / Dh)
    pos = jnp.arange(T, dtype=jnp.float32)[:, None]
    m_theta = jnp.concatenate([pos * theta[None, :]] * 2, axis=-1)
    cos = jnp.cos(m_theta).astype(jnp.float16).astype(jnp.float32)
    sin = jnp.sin(m_theta).astype(jnp.float16).astype(jnp.float32)

    def rope(x):
        half = Dh // 2
        rot = jnp.concatenate([-x[..., half:], x[..., :half]], axis=-1)
        return cos[None] * x + sin[None] * rot

    qh, kh = rope(qh), rope(kh)
    s = jnp.einsum("btd,bsd->bts", qh, kh) / math.sqrt(Dh)
    p = jax.nn.softmax(s, axis=-1)
    a = jnp.einsum("bts,bsd->btd", p, vh)
    a = a.transpose(1, 0, 2).reshape(T, B, E)
    return (a.reshape(T * B, E) @ w_out.T).reshape(T, B, E)


# ----------------------------------- main ------------------------------------

if __name__ == "__main__":
    # seq=8, batch=2, embed_dim=128, num_heads=4 -> head_dim=32
    T, B, E, H = 8, 2, 128, 4
    Dh = E // H
    scale = 1.0 / math.sqrt(Dh)

    key = jax.random.PRNGKey(0)
    k1, k2, k3 = jax.random.split(key, 3)
    query = jax.random.normal(k1, (T, B, E), dtype=jnp.float32)
    w_cattn = jax.random.normal(k2, (3 * E, E), dtype=jnp.float32) * 0.02  # (out, in)
    w_out = jax.random.normal(k3, (E, E), dtype=jnp.float32) * 0.02

    # weight prep OUTSIDE the hot path: transpose, fold the 1/sqrt(Dh) attention
    # scale into the q output columns, and pre-cast to bf16 for the MXU.
    w_cattn_fused = jnp.asarray(w_cattn.T).at[:, :E].multiply(scale).astype(jnp.bfloat16)
    w_out_t = jnp.asarray(w_out.T).astype(jnp.bfloat16)

    out = causal_self_attention_forward(query, w_cattn_fused, w_out_t, num_heads=H)
    out = jax.block_until_ready(out)

    ref = reference_forward(query, w_cattn, w_out, H)
    assert out.shape == (T, B, E)
    max_err = float(jnp.max(jnp.abs(out - ref)))
    # bf16 MXU operands / bf16 intermediates + approx reciprocal -> loose tolerance
    assert jnp.allclose(out, ref, rtol=2e-2, atol=3e-3), \
        f"mismatch vs reference (max abs err {max_err})"

    print("KERNEL_OK")
</pallas_src>

<mosaic_0001>
module attributes {stable_mosaic.version = 11 : i64} {
  func.func @_qkv_rope_kernel(%arg0: i32, %arg1: i32, %arg2: i32, %arg3: memref<1x8x128xf32, #tpu.memory_space<vmem>>, %arg4: memref<128x384xbf16, #tpu.memory_space<vmem>>, %arg5: memref<8x128xf32, #tpu.memory_space<vmem>>, %arg6: memref<8x128xf32, #tpu.memory_space<vmem>>, %arg7: memref<1x8x384xbf16, #tpu.memory_space<vmem>>, %arg8: memref<8x384xf32, #tpu.memory_space<vmem>>) attributes {dimension_semantics = [#tpu.dimension_semantics<parallel>, #tpu.dimension_semantics<parallel>, #tpu.dimension_semantics<arbitrary>], iteration_bounds = array<i64: 2, 1, 1>, scalar_prefetch = 0 : i64, scratch_operands = 1 : i64, tpu.core_type = #tpu.core_type<tc>, window_params = [{transform_indices = @transform_0, window_bounds = array<i64: 1, 8, 128>}, {transform_indices = @transform_1, window_bounds = array<i64: 128, 384>}, {transform_indices = @transform_2, window_bounds = array<i64: 8, 128>}, {transform_indices = @transform_3, window_bounds = array<i64: 8, 128>}, {transform_indices = @transform_4, window_bounds = array<i64: 1, 8, 384>}]} {
    %c0_i32 = arith.constant 0 : i32
    %0 = arith.cmpi eq, %arg2, %c0_i32 : i32
    %1 = arith.extui %0 : i1 to i32
    %c0_i32_0 = arith.constant 0 : i32
    %2 = arith.cmpi ne, %1, %c0_i32_0 : i32
    scf.if %2 {
      %cst_11 = arith.constant 0.000000e+00 : f32
      %14 = vector.broadcast %cst_11 : f32 to vector<8x384xf32>
      %c0_12 = arith.constant 0 : index
      %c0_13 = arith.constant 0 : index
      %15 = vector.load %arg8[%c0_12, %c0_13] : memref<8x384xf32, #tpu.memory_space<vmem>>, vector<8x384xf32>
      tpu.vector_store %arg8[%c0_12, %c0_13], %14 {strides = array<i32>} : memref<8x384xf32, #tpu.memory_space<vmem>>, vector<8x384xf32>,
    } else {
    }
    %c0 = arith.constant 0 : index
    %c0_1 = arith.constant 0 : index
    %3 = vector.load %arg8[%c0, %c0_1] : memref<8x384xf32, #tpu.memory_space<vmem>>, vector<8x384xf32>
    %c0_2 = arith.constant 0 : index
    %c0_3 = arith.constant 0 : index
    %c0_4 = arith.constant 0 : index
    %4 = vector.load %arg3[%c0_2, %c0_3, %c0_4] : memref<1x8x128xf32, #tpu.memory_space<vmem>>, vector<1x8x128xf32>
    %5 = vector.shape_cast %4 : vector<1x8x128xf32> to vector<8x128xf32>
    %6 = arith.truncf %5 : vector<8x128xf32> to vector<8x128xbf16>
    %c0_5 = arith.constant 0 : index
    %c0_6 = arith.constant 0 : index
    %7 = vector.load %arg4[%c0_5, %c0_6] : memref<128x384xbf16, #tpu.memory_space<vmem>>, vector<128x384xbf16>
    %cst = arith.constant dense<0.000000e+00> : vector<8x384xf32>
    %8 = tpu.matmul %6, %7, %cst {dimension_numbers = #tpu.dot_dimension_numbers<[1], [0], [0], [1], [0, 0, 1, 1], [], []>} : vector<8x128xbf16>, vector<128x384xbf16>, vector<8x384xf32> -> vector<8x384xf32>
    %9 = arith.addf %3, %8 : vector<8x384xf32>
    %c0_7 = arith.constant 0 : index
    %c0_8 = arith.constant 0 : index
    %10 = vector.load %arg8[%c0_7, %c0_8] : memref<8x384xf32, #tpu.memory_space<vmem>>, vector<8x384xf32>
    tpu.vector_store %arg8[%c0_7, %c0_8], %9 {strides = array<i32>} : memref<8x384xf32, #tpu.memory_space<vmem>>, vector<8x384xf32>,
    %c0_i32_9 = arith.constant 0 : i32
    %11 = arith.cmpi eq, %arg2, %c0_i32_9 : i32
    %12 = arith.extui %11 : i1 to i32
    %c0_i32_10 = arith.constant 0 : i32
    %13 = arith.cmpi ne, %12, %c0_i32_10 : i32
    scf.if %13 {
      %c0_11 = arith.constant 0 : index
      %c0_12 = arith.constant 0 : index
      %14 = vector.load %arg8[%c0_11, %c0_12] : memref<8x384xf32, #tpu.memory_space<vmem>>, vector<8x384xf32>
      %15 = vector.extract_strided_slice %14 {offsets = [0, 0], sizes = [8, 256], strides = [1, 1]} : vector<8x384xf32> to vector<8x256xf32>
      %16 = vector.extract_strided_slice %14 {offsets = [0, 256], sizes = [8, 128], strides = [1, 1]} : vector<8x384xf32> to vector<8x128xf32>
      %c0_13 = arith.constant 0 : index
      %c0_14 = arith.constant 0 : index
      %17 = vector.load %arg5[%c0_13, %c0_14] : memref<8x128xf32, #tpu.memory_space<vmem>>, vector<8x128xf32>
      %c0_15 = arith.constant 0 : index
      %c0_16 = arith.constant 0 : index
      %18 = vector.load %arg6[%c0_15, %c0_16] : memref<8x128xf32, #tpu.memory_space<vmem>>, vector<8x128xf32>
      %19 = tpu.concatenate %17, %17 in 1 : vector<8x128xf32>, vector<8x128xf32> -> vector<8x256xf32>
      %20 = tpu.concatenate %18, %18 in 1 : vector<8x128xf32>, vector<8x128xf32> -> vector<8x256xf32>
      %c240_i32 = arith.constant 240 : i32
      %21 = tpu.dynamic_rotate %15 by %c240_i32 dim 1 : vector<8x256xf32>, i32 -> vector<8x256xf32>
      %c16_i32 = arith.constant 16 : i32
      %22 = tpu.dynamic_rotate %15 by %c16_i32 dim 1 : vector<8x256xf32>, i32 -> vector<8x256xf32>
      %23 = tpu.iota {dimensions = array<i32: 1>} : vector<8x256xi32>
      %c32_i32 = arith.constant 32 : i32
      %c0_i32_17 = arith.constant 0 : i32
      %24 = arith.cmpi eq, %c32_i32, %c0_i32_17 : i32
      %c1_i32 = arith.constant 1 : i32
      %25 = arith.select %24, %c1_i32, %c32_i32 : i32
      %26 = vector.broadcast %25 : i32 to vector<8x256xi32>
      %27 = arith.remsi %23, %26 : vector<8x256xi32>
      %c0_i32_18 = arith.constant 0 : i32
      %28 = vector.broadcast %c0_i32_18 : i32 to vector<8x256xi32>
      %29 = arith.cmpi ne, %27, %28 : vector<8x256xi32>
      %c0_i32_19 = arith.constant 0 : i32
      %30 = vector.broadcast %c0_i32_19 : i32 to vector<8x256xi32>
      %31 = arith.cmpi slt, %27, %30 : vector<8x256xi32>
      %c0_i32_20 = arith.constant 0 : i32
      %32 = arith.cmpi slt, %25, %c0_i32_20 : i32
      %33 = vector.broadcast %32 : i1 to vector<8x256xi1>
      %34 = vector.broadcast %33 : vector<8x256xi1> to vector<8x256xi1>
      %35 = arith.xori %31, %34 : vector<8x256xi1>
      %36 = arith.andi %35, %29 : vector<8x256xi1>
      %37 = vector.broadcast %25 : i32 to vector<8x256xi32>
      %38 = arith.addi %27, %37 : vector<8x256xi32>
      %39 = arith.select %36, %38, %27 : vector<8x256xi1>, vector<8x256xi32>
      %c16_i32_21 = arith.constant 16 : i32
      %40 = vector.broadcast %c16_i32_21 : i32 to vector<8x256xi32>
      %41 = arith.cmpi slt, %39, %40 : vector<8x256xi32>
      %cst_22 = arith.constant 0.000000e+00 : f32
      %42 = vector.broadcast %cst_22 : f32 to vector<8x256xf32>
      %43 = arith.subf %42, %21 : vector<8x256xf32>
      %44 = arith.select %41, %43, %22 : vector<8x256xi1>, vector<8x256xf32>
      %45 = arith.mulf %19, %15 : vector<8x256xf32>
      %46 = arith.mulf %20, %44 : vector<8x256xf32>
      %47 = arith.addf %45, %46 : vector<8x256xf32>
      %48 = tpu.concatenate %47, %16 in 1 : vector<8x256xf32>, vector<8x128xf32> -> vector<8x384xf32>
      %49 = arith.truncf %48 : vector<8x384xf32> to vector<8x384xbf16>
      %c0_23 = arith.constant 0 : index
      %c0_24 = arith.constant 0 : index
      %c0_25 = arith.constant 0 : index
      %50 = vector.load %arg7[%c0_23, %c0_24, %c0_25] : memref<1x8x384xbf16, #tpu.memory_space<vmem>>, vector<1x8x384xbf16>
      %51 = vector.shape_cast %50 : vector<1x8x384xbf16> to vector<8x384xbf16>
      %52 = vector.shape_cast %49 : vector<8x384xbf16> to vector<1x8x384xbf16>
      tpu.vector_store %arg7[%c0_23, %c0_24, %c0_25], %52 {strides = array<i32>} : memref<1x8x384xbf16, #tpu.memory_space<vmem>>, vector<1x8x384xbf16>,
    } else {
    }
    return
  }
  func.func @transform_0(%arg0: i32, %arg1: i32, %arg2: i32) -> (i32, i32, i32) {
    %c0_i32 = arith.constant 0 : i32
    return %arg0, %arg1, %arg2 : i32, i32, i32
  }
  func.func @transform_1(%arg0: i32, %arg1: i32, %arg2: i32) -> (i32, i32) {
    %c0_i32 = arith.constant 0 : i32
    %c0_i32_0 = arith.constant 0 : i32
    return %arg2, %c0_i32 : i32, i32
  }
  func.func @transform_2(%arg0: i32, %arg1: i32, %arg2: i32) -> (i32, i32) {
    %c0_i32 = arith.constant 0 : i32
    %c0_i32_0 = arith.constant 0 : i32
    return %arg1, %c0_i32 : i32, i32
  }
  func.func @transform_3(%arg0: i32, %arg1: i32, %arg2: i32) -> (i32, i32) {
    %c0_i32 = arith.constant 0 : i32
    %c0_i32_0 = arith.constant 0 : i32
    return %arg1, %c0_i32 : i32, i32
  }
  func.func @transform_4(%arg0: i32, %arg1: i32, %arg2: i32) -> (i32, i32, i32) {
    %c0_i32 = arith.constant 0 : i32
    %c0_i32_0 = arith.constant 0 : i32
    return %arg0, %arg1, %c0_i32 : i32, i32, i32
  }
}

module attributes {stable_mosaic.version = 11 : i64} {
  func.func @_flash_attn_kernel(%arg0: i32, %arg1: i32, %arg2: i32, %arg3: memref<1x8x128xbf16, #tpu.memory_space<vmem>>, %arg4: memref<1x8x128xbf16, #tpu.memory_space<vmem>>, %arg5: memref<1x8x128xbf16, #tpu.memory_space<vmem>>, %arg6: memref<1x8x128xbf16, #tpu.memory_space<vmem>>, %arg7: memref<4x8xf32, #tpu.memory_space<vmem>>, %arg8: memref<4x8xf32, #tpu.memory_space<vmem>>, %arg9: memref<4x8x32xf32, #tpu.memory_space<vmem>>) attributes {dimension_semantics = [#tpu.dimension_semantics<parallel>, #tpu.dimension_semantics<parallel>, #tpu.dimension_semantics<arbitrary>], iteration_bounds = array<i64: 2, 1, 1>, scalar_prefetch = 0 : i64, scratch_operands = 3 : i64, tpu.core_type = #tpu.core_type<tc>, window_params = [{transform_indices = @transform_0, window_bounds = array<i64: 1, 8, 128>}, {transform_indices = @transform_1, window_bounds = array<i64: 1, 8, 128>}, {transform_indices = @transform_2, window_bounds = array<i64: 1, 8, 128>}, {transform_indices = @transform_3, window_bounds = array<i64: 1, 8, 128>}]} {
    %c0_i32 = arith.constant 0 : i32
    %0 = arith.cmpi eq, %arg2, %c0_i32 : i32
    %1 = arith.extui %0 : i1 to i32
    %c0_i32_0 = arith.constant 0 : i32
    %2 = arith.cmpi ne, %1, %c0_i32_0 : i32
    scf.if %2 {
      %cst_34 = arith.constant 0xFF800000 : f32
      %75 = vector.broadcast %cst_34 : f32 to vector<4x8xf32>
      %c0_35 = arith.constant 0 : index
      %c0_36 = arith.constant 0 : index
      %76 = vector.load %arg7[%c0_35, %c0_36] : memref<4x8xf32, #tpu.memory_space<vmem>>, vector<4x8xf32>
      tpu.vector_store %arg7[%c0_35, %c0_36], %75 {strides = array<i32>} : memref<4x8xf32, #tpu.memory_space<vmem>>, vector<4x8xf32>,
      %cst_37 = arith.constant 0.000000e+00 : f32
      %77 = vector.broadcast %cst_37 : f32 to vector<4x8xf32>
      %c0_38 = arith.constant 0 : index
      %c0_39 = arith.constant 0 : index
      %78 = vector.load %arg8[%c0_38, %c0_39] : memref<4x8xf32, #tpu.memory_space<vmem>>, vector<4x8xf32>
      tpu.vector_store %arg8[%c0_38, %c0_39], %77 {strides = array<i32>} : memref<4x8xf32, #tpu.memory_space<vmem>>, vector<4x8xf32>,
      %cst_40 = arith.constant 0.000000e+00 : f32
      %79 = vector.broadcast %cst_40 : f32 to vector<4x8x32xf32>
      %c0_41 = arith.constant 0 : index
      %c0_42 = arith.constant 0 : index
      %c0_43 = arith.constant 0 : index
      %80 = vector.load %arg9[%c0_41, %c0_42, %c0_43] : memref<4x8x32xf32, #tpu.memory_space<vmem>>, vector<4x8x32xf32>
      tpu.vector_store %arg9[%c0_41, %c0_42, %c0_43], %79 {strides = array<i32>} : memref<4x8x32xf32, #tpu.memory_space<vmem>>, vector<4x8x32xf32>,
    } else {
    }
    %c0 = arith.constant 0 : index
    %c0_1 = arith.constant 0 : index
    %c0_2 = arith.constant 0 : index
    %3 = vector.load %arg3[%c0, %c0_1, %c0_2] : memref<1x8x128xbf16, #tpu.memory_space<vmem>>, vector<1x8x128xbf16>
    %4 = vector.shape_cast %3 : vector<1x8x128xbf16> to vector<8x128xbf16>
    %c0_3 = arith.constant 0 : index
    %c0_4 = arith.constant 0 : index
    %c0_5 = arith.constant 0 : index
    %5 = vector.load %arg4[%c0_3, %c0_4, %c0_5] : memref<1x8x128xbf16, #tpu.memory_space<vmem>>, vector<1x8x128xbf16>
    %6 = vector.shape_cast %5 : vector<1x8x128xbf16> to vector<8x128xbf16>
    %c0_6 = arith.constant 0 : index
    %c0_7 = arith.constant 0 : index
    %c0_8 = arith.constant 0 : index
    %7 = vector.load %arg5[%c0_6, %c0_7, %c0_8] : memref<1x8x128xbf16, #tpu.memory_space<vmem>>, vector<1x8x128xbf16>
    %8 = vector.shape_cast %7 : vector<1x8x128xbf16> to vector<8x128xbf16>
    %9 = vector.extract_strided_slice %4 {offsets = [0, 0], sizes = [8, 32], strides = [1, 1]} : vector<8x128xbf16> to vector<8x32xbf16>
    %10 = vector.extract_strided_slice %6 {offsets = [0, 0], sizes = [8, 32], strides = [1, 1]} : vector<8x128xbf16> to vector<8x32xbf16>
    %cst = arith.constant dense<0.000000e+00> : vector<8x8xf32>
    %11 = tpu.matmul %9, %10, %cst {dimension_numbers = #tpu.dot_dimension_numbers<[1], [1], [0], [0], [0, 0, 1, 0], [], []>} : vector<8x32xbf16>, vector<8x32xbf16>, vector<8x8xf32> -> vector<8x8xf32>
    %12 = vector.extract_strided_slice %4 {offsets = [0, 32], sizes = [8, 32], strides = [1, 1]} : vector<8x128xbf16> to vector<8x32xbf16>
    %13 = vector.extract_strided_slice %6 {offsets = [0, 32], sizes = [8, 32], strides = [1, 1]} : vector<8x128xbf16> to vector<8x32xbf16>
    %cst_9 = arith.constant dense<0.000000e+00> : vector<8x8xf32>
    %14 = tpu.matmul %12, %13, %cst_9 {dimension_numbers = #tpu.dot_dimension_numbers<[1], [1], [0], [0], [0, 0, 1, 0], [], []>} : vector<8x32xbf16>, vector<8x32xbf16>, vector<8x8xf32> -> vector<8x8xf32>
    %15 = vector.extract_strided_slice %4 {offsets = [0, 64], sizes = [8, 32], strides = [1, 1]} : vector<8x128xbf16> to vector<8x32xbf16>
    %16 = vector.extract_strided_slice %6 {offsets = [0, 64], sizes = [8, 32], strides = [1, 1]} : vector<8x128xbf16> to vector<8x32xbf16>
    %cst_10 = arith.constant dense<0.000000e+00> : vector<8x8xf32>
    %17 = tpu.matmul %15, %16, %cst_10 {dimension_numbers = #tpu.dot_dimension_numbers<[1], [1], [0], [0], [0, 0, 1, 0], [], []>} : vector<8x32xbf16>, vector<8x32xbf16>, vector<8x8xf32> -> vector<8x8xf32>
    %18 = vector.extract_strided_slice %4 {offsets = [0, 96], sizes = [8, 32], strides = [1, 1]} : vector<8x128xbf16> to vector<8x32xbf16>
    %19 = vector.extract_strided_slice %6 {offsets = [0, 96], sizes = [8, 32], strides = [1, 1]} : vector<8x128xbf16> to vector<8x32xbf16>
    %cst_11 = arith.constant dense<0.000000e+00> : vector<8x8xf32>
    %20 = tpu.matmul %18, %19, %cst_11 {dimension_numbers = #tpu.dot_dimension_numbers<[1], [1], [0], [0], [0, 0, 1, 0], [], []>} : vector<8x32xbf16>, vector<8x32xbf16>, vector<8x8xf32> -> vector<8x8xf32>
    %21 = vector.shape_cast %11 : vector<8x8xf32> to vector<1x8x8xf32>
    %22 = vector.shape_cast %14 : vector<8x8xf32> to vector<1x8x8xf32>
    %23 = vector.shape_cast %17 : vector<8x8xf32> to vector<1x8x8xf32>
    %24 = vector.shape_cast %20 : vector<8x8xf32> to vector<1x8x8xf32>
    %25 = tpu.concatenate %21, %22, %23, %24 in 0 : vector<1x8x8xf32>, vector<1x8x8xf32>, vector<1x8x8xf32>, vector<1x8x8xf32> -> vector<4x8x8xf32>
    %c0_12 = arith.constant 0 : index
    %c0_13 = arith.constant 0 : index
    %26 = vector.load %arg7[%c0_12, %c0_13] : memref<4x8xf32, #tpu.memory_space<vmem>>, vector<4x8xf32>
    %cst_14 = arith.constant dense<0xFF800000> : vector<4x8xf32>
    %27 = vector.multi_reduction <maximumf>, %25, %cst_14 [2] : vector<4x8x8xf32> to vector<4x8xf32>
    %28 = arith.maximumf %26, %27 : vector<4x8xf32>
    %29 = arith.subf %26, %28 : vector<4x8xf32>
    %30 = math.exp %29 : vector<4x8xf32>
    %31 = vector.shape_cast %28 : vector<4x8xf32> to vector<4x8x1xf32>
    %32 = vector.broadcast %31 : vector<4x8x1xf32> to vector<4x8x8xf32>
    %33 = arith.subf %25, %32 : vector<4x8x8xf32>
    %34 = math.exp %33 : vector<4x8x8xf32>
    %c0_15 = arith.constant 0 : index
    %c0_16 = arith.constant 0 : index
    %35 = vector.load %arg8[%c0_15, %c0_16] : memref<4x8xf32, #tpu.memory_space<vmem>>, vector<4x8xf32>
    %36 = arith.mulf %30, %35 : vector<4x8xf32>
    %cst_17 = arith.constant dense<0.000000e+00> : vector<4x8xf32>
    %37 = vector.multi_reduction <add>, %34, %cst_17 [2] : vector<4x8x8xf32> to vector<4x8xf32>
    %38 = arith.addf %36, %37 : vector<4x8xf32>
    %c0_18 = arith.constant 0 : index
    %c0_19 = arith.constant 0 : index
    %39 = vector.load %arg8[%c0_18, %c0_19] : memref<4x8xf32, #tpu.memory_space<vmem>>, vector<4x8xf32>
    tpu.vector_store %arg8[%c0_18, %c0_19], %38 {strides = array<i32>} : memref<4x8xf32, #tpu.memory_space<vmem>>, vector<4x8xf32>,
    %c0_20 = arith.constant 0 : index
    %c0_21 = arith.constant 0 : index
    %40 = vector.load %arg7[%c0_20, %c0_21] : memref<4x8xf32, #tpu.memory_space<vmem>>, vector<4x8xf32>
    tpu.vector_store %arg7[%c0_20, %c0_21], %28 {strides = array<i32>} : memref<4x8xf32, #tpu.memory_space<vmem>>, vector<4x8xf32>,
    %41 = vector.extract_strided_slice %34 {offsets = [0, 0, 0], sizes = [1, 8, 8], strides = [1, 1, 1]} : vector<4x8x8xf32> to vector<1x8x8xf32>
    %42 = vector.shape_cast %41 : vector<1x8x8xf32> to vector<8x8xf32>
    %43 = arith.truncf %42 : vector<8x8xf32> to vector<8x8xbf16>
    %44 = vector.extract_strided_slice %8 {offsets = [0, 0], sizes = [8, 32], strides = [1, 1]} : vector<8x128xbf16> to vector<8x32xbf16>
    %cst_22 = arith.constant dense<0.000000e+00> : vector<8x32xf32>
    %45 = tpu.matmul %43, %44, %cst_22 {dimension_numbers = #tpu.dot_dimension_numbers<[1], [0], [0], [1], [0, 0, 1, 1], [], []>} : vector<8x8xbf16>, vector<8x32xbf16>, vector<8x32xf32> -> vector<8x32xf32>
    %46 = vector.extract_strided_slice %34 {offsets = [1, 0, 0], sizes = [1, 8, 8], strides = [1, 1, 1]} : vector<4x8x8xf32> to vector<1x8x8xf32>
    %47 = vector.shape_cast %46 : vector<1x8x8xf32> to vector<8x8xf32>
    %48 = arith.truncf %47 : vector<8x8xf32> to vector<8x8xbf16>
    %49 = vector.extract_strided_slice %8 {offsets = [0, 32], sizes = [8, 32], strides = [1, 1]} : vector<8x128xbf16> to vector<8x32xbf16>
    %cst_23 = arith.constant dense<0.000000e+00> : vector<8x32xf32>
    %50 = tpu.matmul %48, %49, %cst_23 {dimension_numbers = #tpu.dot_dimension_numbers<[1], [0], [0], [1], [0, 0, 1, 1], [], []>} : vector<8x8xbf16>, vector<8x32xbf16>, vector<8x32xf32> -> vector<8x32xf32>
    %51 = vector.extract_strided_slice %34 {offsets = [2, 0, 0], sizes = [1, 8, 8], strides = [1, 1, 1]} : vector<4x8x8xf32> to vector<1x8x8xf32>
    %52 = vector.shape_cast %51 : vector<1x8x8xf32> to vector<8x8xf32>
    %53 = arith.truncf %52 : vector<8x8xf32> to vector<8x8xbf16>
    %54 = vector.extract_strided_slice %8 {offsets = [0, 64], sizes = [8, 32], strides = [1, 1]} : vector<8x128xbf16> to vector<8x32xbf16>
    %cst_24 = arith.constant dense<0.000000e+00> : vector<8x32xf32>
    %55 = tpu.matmul %53, %54, %cst_24 {dimension_numbers = #tpu.dot_dimension_numbers<[1], [0], [0], [1], [0, 0, 1, 1], [], []>} : vector<8x8xbf16>, vector<8x32xbf16>, vector<8x32xf32> -> vector<8x32xf32>
    %56 = vector.extract_strided_slice %34 {offsets = [3, 0, 0], sizes = [1, 8, 8], strides = [1, 1, 1]} : vector<4x8x8xf32> to vector<1x8x8xf32>
    %57 = vector.shape_cast %56 : vector<1x8x8xf32> to vector<8x8xf32>
    %58 = arith.truncf %57 : vector<8x8xf32> to vector<8x8xbf16>
    %59 = vector.extract_strided_slice %8 {offsets = [0, 96], sizes = [8, 32], strides = [1, 1]} : vector<8x128xbf16> to vector<8x32xbf16>
    %cst_25 = arith.constant dense<0.000000e+00> : vector<8x32xf32>
    %60 = tpu.matmul %58, %59, %cst_25 {dimension_numbers = #tpu.dot_dimension_numbers<[1], [0], [0], [1], [0, 0, 1, 1], [], []>} : vector<8x8xbf16>, vector<8x32xbf16>, vector<8x32xf32> -> vector<8x32xf32>
    %61 = vector.shape_cast %45 : vector<8x32xf32> to vector<1x8x32xf32>
    %62 = vector.shape_cast %50 : vector<8x32xf32> to vector<1x8x32xf32>
    %63 = vector.shape_cast %55 : vector<8x32xf32> to vector<1x8x32xf32>
    %64 = vector.shape_cast %60 : vector<8x32xf32> to vector<1x8x32xf32>
    %65 = tpu.concatenate %61, %62, %63, %64 in 0 : vector<1x8x32xf32>, vector<1x8x32xf32>, vector<1x8x32xf32>, vector<1x8x32xf32> -> vector<4x8x32xf32>
    %66 = vector.shape_cast %30 : vector<4x8xf32> to vector<4x8x1xf32>
    %c0_26 = arith.constant 0 : index
    %c0_27 = arith.constant 0 : index
    %c0_28 = arith.constant 0 : index
    %67 = vector.load %arg9[%c0_26, %c0_27, %c0_28] : memref<4x8x32xf32, #tpu.memory_space<vmem>>, vector<4x8x32xf32>
    %68 = vector.broadcast %66 : vector<4x8x1xf32> to vector<4x8x32xf32>
    %69 = arith.mulf %68, %67 : vector<4x8x32xf32>
    %70 = arith.addf %69, %65 : vector<4x8x32xf32>
    %c0_29 = arith.constant 0 : index
    %c0_30 = arith.constant 0 : index
    %c0_31 = arith.constant 0 : index
    %71 = vector.load %arg9[%c0_29, %c0_30, %c0_31] : memref<4x8x32xf32, #tpu.memory_space<vmem>>, vector<4x8x32xf32>
    tpu.vector_store %arg9[%c0_29, %c0_30, %c0_31], %70 {strides = array<i32>} : memref<4x8x32xf32, #tpu.memory_space<vmem>>, vector<4x8x32xf32>,
    %c0_i32_32 = arith.constant 0 : i32
    %72 = arith.cmpi eq, %arg2, %c0_i32_32 : i32
    %73 = arith.extui %72 : i1 to i32
    %c0_i32_33 = arith.constant 0 : i32
    %74 = arith.cmpi ne, %73, %c0_i32_33 : i32
    scf.if %74 {
      %c0_34 = arith.constant 0 : index
      %c0_35 = arith.constant 0 : index
      %75 = vector.load %arg8[%c0_34, %c0_35] : memref<4x8xf32, #tpu.memory_space<vmem>>, vector<4x8xf32>
      %76 = tpu.reciprocal %75 {approx = true} : vector<4x8xf32> -> vector<4x8xf32>
      %c0_36 = arith.constant 0 : index
      %c0_37 = arith.constant 0 : index
      %c0_38 = arith.constant 0 : index
      %77 = vector.load %arg9[%c0_36, %c0_37, %c0_38] : memref<4x8x32xf32, #tpu.memory_space<vmem>>, vector<4x8x32xf32>
      %78 = vector.shape_cast %76 : vector<4x8xf32> to vector<4x8x1xf32>
      %79 = vector.broadcast %78 : vector<4x8x1xf32> to vector<4x8x32xf32>
      %80 = arith.mulf %77, %79 : vector<4x8x32xf32>
      %81 = vector.extract_strided_slice %80 {offsets = [0, 0, 0], sizes = [1, 8, 32], strides = [1, 1, 1]} : vector<4x8x32xf32> to vector<1x8x32xf32>
      %82 = vector.shape_cast %81 : vector<1x8x32xf32> to vector<8x32xf32>
      %83 = vector.extract_strided_slice %80 {offsets = [1, 0, 0], sizes = [1, 8, 32], strides = [1, 1, 1]} : vector<4x8x32xf32> to vector<1x8x32xf32>
      %84 = vector.shape_cast %83 : vector<1x8x32xf32> to vector<8x32xf32>
      %85 = vector.extract_strided_slice %80 {offsets = [2, 0, 0], sizes = [1, 8, 32], strides = [1, 1, 1]} : vector<4x8x32xf32> to vector<1x8x32xf32>
      %86 = vector.shape_cast %85 : vector<1x8x32xf32> to vector<8x32xf32>
      %87 = vector.extract_strided_slice %80 {offsets = [3, 0, 0], sizes = [1, 8, 32], strides = [1, 1, 1]} : vector<4x8x32xf32> to vector<1x8x32xf32>
      %88 = vector.shape_cast %87 : vector<1x8x32xf32> to vector<8x32xf32>
      %89 = tpu.concatenate %82, %84, %86, %88 in 1 : vector<8x32xf32>, vector<8x32xf32>, vector<8x32xf32>, vector<8x32xf32> -> vector<8x128xf32>
      %90 = arith.truncf %89 : vector<8x128xf32> to vector<8x128xbf16>
      %c0_39 = arith.constant 0 : index
      %c0_40 = arith.constant 0 : index
      %c0_41 = arith.constant 0 : index
      %91 = vector.load %arg6[%c0_39, %c0_40, %c0_41] : memref<1x8x128xbf16, #tpu.memory_space<vmem>>, vector<1x8x128xbf16>
      %92 = vector.shape_cast %91 : vector<1x8x128xbf16> to vector<8x128xbf16>
      %93 = vector.shape_cast %90 : vector<8x128xbf16> to vector<1x8x128xbf16>
      tpu.vector_store %arg6[%c0_39, %c0_40, %c0_41], %93 {strides = array<i32>} : memref<1x8x128xbf16, #tpu.memory_space<vmem>>, vector<1x8x128xbf16>,
    } else {
    }
    return
  }
  func.func @transform_0(%arg0: i32, %arg1: i32, %arg2: i32) -> (i32, i32, i32) {
    %c0_i32 = arith.constant 0 : i32
    %c0_i32_0 = arith.constant 0 : i32
    return %arg0, %arg1, %c0_i32 : i32, i32, i32
  }
  func.func @transform_1(%arg0: i32, %arg1: i32, %arg2: i32) -> (i32, i32, i32) {
    %c1_i32 = arith.constant 1 : i32
    %c0_i32 = arith.constant 0 : i32
    return %arg0, %arg2, %c1_i32 : i32, i32, i32
  }
  func.func @transform_2(%arg0: i32, %arg1: i32, %arg2: i32) -> (i32, i32, i32) {
    %c2_i32 = arith.constant 2 : i32
    %c0_i32 = arith.constant 0 : i32
    return %arg0, %arg2, %c2_i32 : i32, i32, i32
  }
  func.func @transform_3(%arg0: i32, %arg1: i32, %arg2: i32) -> (i32, i32, i32) {
    %c0_i32 = arith.constant 0 : i32
    %c0_i32_0 = arith.constant 0 : i32
    return %arg0, %arg1, %c0_i32 : i32, i32, i32
  }
}

module attributes {stable_mosaic.version = 11 : i64} {
  func.func @_matmul_kernel(%arg0: i32, %arg1: i32, %arg2: i32, %arg3: memref<16x128xbf16, #tpu.memory_space<vmem>>, %arg4: memref<128x128xbf16, #tpu.memory_space<vmem>>, %arg5: memref<16x128xf32, #tpu.memory_space<vmem>>, %arg6: memref<16x128xf32, #tpu.memory_space<vmem>>) attributes {dimension_semantics = [#tpu.dimension_semantics<parallel>, #tpu.dimension_semantics<parallel>, #tpu.dimension_semantics<arbitrary>], iteration_bounds = array<i64: 1, 1, 1>, scalar_prefetch = 0 : i64, scratch_operands = 1 : i64, tpu.core_type = #tpu.core_type<tc>, window_params = [{transform_indices = @transform_0, window_bounds = array<i64: 16, 128>}, {transform_indices = @transform_1, window_bounds = array<i64: 128, 128>}, {transform_indices = @transform_2, window_bounds = array<i64: 16, 128>}]} {
    %c0_i32 = arith.constant 0 : i32
    %0 = arith.cmpi eq, %arg2, %c0_i32 : i32
    %1 = arith.extui %0 : i1 to i32
    %c0_i32_0 = arith.constant 0 : i32
    %2 = arith.cmpi ne, %1, %c0_i32_0 : i32
    scf.if %2 {
      %cst_10 = arith.constant 0.000000e+00 : f32
      %12 = vector.broadcast %cst_10 : f32 to vector<16x128xf32>
      %c0_11 = arith.constant 0 : index
      %c0_12 = arith.constant 0 : index
      %13 = vector.load %arg6[%c0_11, %c0_12] : memref<16x128xf32, #tpu.memory_space<vmem>>, vector<16x128xf32>
      tpu.vector_store %arg6[%c0_11, %c0_12], %12 {strides = array<i32>} : memref<16x128xf32, #tpu.memory_space<vmem>>, vector<16x128xf32>,
    } else {
    }
    %c0 = arith.constant 0 : index
    %c0_1 = arith.constant 0 : index
    %3 = vector.load %arg6[%c0, %c0_1] : memref<16x128xf32, #tpu.memory_space<vmem>>, vector<16x128xf32>
    %c0_2 = arith.constant 0 : index
    %c0_3 = arith.constant 0 : index
    %4 = vector.load %arg3[%c0_2, %c0_3] : memref<16x128xbf16, #tpu.memory_space<vmem>>, vector<16x128xbf16>
    %c0_4 = arith.constant 0 : index
    %c0_5 = arith.constant 0 : index
    %5 = vector.load %arg4[%c0_4, %c0_5] : memref<128x128xbf16, #tpu.memory_space<vmem>>, vector<128x128xbf16>
    %cst = arith.constant dense<0.000000e+00> : vector<16x128xf32>
    %6 = tpu.matmul %4, %5, %cst {dimension_numbers = #tpu.dot_dimension_numbers<[1], [0], [0], [1], [0, 0, 1, 1], [], []>} : vector<16x128xbf16>, vector<128x128xbf16>, vector<16x128xf32> -> vector<16x128xf32>
    %7 = arith.addf %3, %6 : vector<16x128xf32>
    %c0_6 = arith.constant 0 : index
    %c0_7 = arith.constant 0 : index
    %8 = vector.load %arg6[%c0_6, %c0_7] : memref<16x128xf32, #tpu.memory_space<vmem>>, vector<16x128xf32>
    tpu.vector_store %arg6[%c0_6, %c0_7], %7 {strides = array<i32>} : memref<16x128xf32, #tpu.memory_space<vmem>>, vector<16x128xf32>,
    %c0_i32_8 = arith.constant 0 : i32
    %9 = arith.cmpi eq, %arg2, %c0_i32_8 : i32
    %10 = arith.extui %9 : i1 to i32
    %c0_i32_9 = arith.constant 0 : i32
    %11 = arith.cmpi ne, %10, %c0_i32_9 : i32
    scf.if %11 {
      %c0_10 = arith.constant 0 : index
      %c0_11 = arith.constant 0 : index
      %12 = vector.load %arg6[%c0_10, %c0_11] : memref<16x128xf32, #tpu.memory_space<vmem>>, vector<16x128xf32>
      %c0_12 = arith.constant 0 : index
      %c0_13 = arith.constant 0 : index
      %13 = vector.load %arg5[%c0_12, %c0_13] : memref<16x128xf32, #tpu.memory_space<vmem>>, vector<16x128xf32>
      tpu.vector_store %arg5[%c0_12, %c0_13], %12 {strides = array<i32>} : memref<16x128xf32, #tpu.memory_space<vmem>>, vector<16x128xf32>,
    } else {
    }
    return
  }
  func.func @transform_0(%arg0: i32, %arg1: i32, %arg2: i32) -> (i32, i32) {
    %c0_i32 = arith.constant 0 : i32
    return %arg0, %arg2 : i32, i32
  }
  func.func @transform_1(%arg0: i32, %arg1: i32, %arg2: i32) -> (i32, i32) {
    %c0_i32 = arith.constant 0 : i32
    return %arg2, %arg1 : i32, i32
  }
  func.func @transform_2(%arg0: i32, %arg1: i32, %arg2: i32) -> (i32, i32) {
    %c0_i32 = arith.constant 0 : i32
    return %arg0, %arg1 : i32, i32
  }
}

</mosaic_0001>

<llo_original>
// kernel: tile.14
$region0: #{tile.14}
  %s0 = inlined_call_operand.vmem [shape: f32[8,4,32], index: 0, kind: input, shape index: {}]
  %s1 = inlined_call_operand.vmem [shape: f32[8,128], index: 1, kind: output, shape index: {}]
  $region1: #{tile.14} parent=0
    #allocation0 [shape = 'u8[32768]{0}', space=vmem, size = 0x8000, scoped, tag = 'scoped mem for input reshape']
    %s3 = sshllo.u32 0, 4
    %s4 = smul.addr 4, 7
    %s5 = scalar_lea.vmem %s0, %s4
    %v6 = vld [vmem:[%s5] sm:%s3]
    %s7 = scalar_lea.vmem [#allocation0], 56
    %8 = vst [vmem:[%s7] sm:%s3] %v6
    %s9 = smul.addr 4, 6
    %s10 = scalar_lea.vmem %s0, %s9
    %v11 = vld [vmem:[%s10] sm:%s3]
    %s12 = scalar_lea.vmem [#allocation0], 48
    %13 = vst [vmem:[%s12] sm:%s3] %v11
    %s14 = smul.addr 4, 5
    %s15 = scalar_lea.vmem %s0, %s14
    %v16 = vld [vmem:[%s15] sm:%s3]
    %s17 = scalar_lea.vmem [#allocation0], 40
    %18 = vst [vmem:[%s17] sm:%s3] %v16
    %s19 = smul.addr 4, 4
    %s20 = scalar_lea.vmem %s0, %s19
    %v21 = vld [vmem:[%s20] sm:%s3]
    %s22 = scalar_lea.vmem [#allocation0], 32
    %23 = vst [vmem:[%s22] sm:%s3] %v21
    %s24 = smul.addr 4, 3
    %s25 = scalar_lea.vmem %s0, %s24
    %v26 = vld [vmem:[%s25] sm:%s3]
    %s27 = scalar_lea.vmem [#allocation0], 24
    %28 = vst [vmem:[%s27] sm:%s3] %v26
    %s29 = smul.addr 4, 2
    %s30 = scalar_lea.vmem %s0, %s29
    %v31 = vld [vmem:[%s30] sm:%s3]
    %s32 = scalar_lea.vmem [#allocation0], 16
    %33 = vst [vmem:[%s32] sm:%s3] %v31
    %s34 = scalar_lea.vmem %s0, 4
    %v35 = vld [vmem:[%s34] sm:%s3]
    %s36 = scalar_lea.vmem [#allocation0], 8
    %37 = vst [vmem:[%s36] sm:%s3] %v35
    %v38 = vld [vmem:[%s0] sm:%s3]
    %39 = vst [vmem:[#allocation0] sm:%s3] %v38
    %v40 = vld [vmem:[#allocation0] ss:$8 sm:$0xf]
    %v41 = vld [vmem:[#allocation0] ss:$8 sm:$0xf0]
    %vm42 = vcmask 1047556
    %v43 = vsel %vm42, %v41, %v40
    %vm44 = vcmask 261120
    %45 = vst.msk [vmem:[%s1] sm:$0xff] %vm44, %v43
    %s46 = scalar_lea.vmem [#allocation0], 3
    %v47 = vld [vmem:[%s46] ss:$8 sm:$0xf]
    %s48 = scalar_lea.vmem [#allocation0], 3
    %v49 = vld [vmem:[%s48] ss:$8 sm:$0xf0]
    %vm50 = vcmask 1047556
    %v51 = vsel %vm50, %v49, %v47
    %52 = vrot.lane.b32.xlu0 %v51, 96
    %v53 = vpop.permute.xlu0 %52
    %vm54 = vcmask 1048320
    %55 = vst.msk [vmem:[%s1] sm:$0xff] %vm54, %v53
    %s56 = scalar_lea.vmem [#allocation0], 2
    %v57 = vld [vmem:[%s56] ss:$8 sm:$0xf]
    %s58 = scalar_lea.vmem [#allocation0], 2
    %v59 = vld [vmem:[%s58] ss:$8 sm:$0xf0]
    %vm60 = vcmask 1047556
    %v61 = vsel %vm60, %v59, %v57
    %62 = vrot.lane.b32.xlu0 %v61, 64
    %v63 = vpop.permute.xlu0 %62
    %vm64 = vcmask 785920
    %65 = vst.msk [vmem:[%s1] sm:$0xff] %vm64, %v63
    %s66 = scalar_lea.vmem [#allocation0], 1
    %v67 = vld [vmem:[%s66] ss:$8 sm:$0xf]
    %s68 = scalar_lea.vmem [#allocation0], 1
    %v69 = vld [vmem:[%s68] ss:$8 sm:$0xf0]
    %vm70 = vcmask 1047556
    %v71 = vsel %vm70, %v69, %v67
    %72 = vrot.lane.b32.xlu0 %v71, 32
    %v73 = vpop.permute.xlu0 %72
    %vm74 = vcmask 523520
    %75 = vst.msk [vmem:[%s1] sm:$0xff] %vm74, %v73

// kernel: causal_self_attention_forward.5
$region0: #{causal_self_attention_forward.5}
  #allocation0 [shape = 'u32[]', space=smem, size = 0x4, offset = 0x4, fixed_abs, tag = 'smem constant byte address 0x4 - core index']
  #allocation1 [shape = 'u32[144,128]{1,0:T(1,128)}', space=vmem, size = 0x12000, scoped, tag = 'internal scratch']
  #allocation2 [shape = 'f32[16,128]{1,0:T(8,128)}', space=vmem, size = 0x2000, scoped, tag = 'scratch operand']
  %s0 = inlined_call_operand.vmem [shape: bf16[16,128], index: 0, kind: input, shape index: {}]
  %s1 = inlined_call_operand.vmem [shape: bf16[128,128], index: 1, kind: input, shape index: {}]
  %s2 = inlined_call_operand.vmem [shape: f32[16,128], index: 2, kind: output, shape index: {}]
  %s3 = sld [smem:[#allocation0]]
  $region26: #{causal_self_attention_forward.5} parent=0
    _
  %s5 = ssub.s32 1, %s3
  %s6 = scalar_select 0, %s5, %s3
  // Predicated region
  $region2: #{causal_self_attention_forward.5} parent=0 // pred_check
    _
  $region3: #{causal_self_attention_forward.5} parent=0 // pred_check_branch
    %8 = sbr.rel (0) target = $region5
  $region4: #{causal_self_attention_forward.5} parent=0 // pred_region
    _
  $region5: #{causal_self_attention_forward.5} parent=0 // pred_fallthru
    _
  // Predicated region
  $region6: #{causal_self_attention_forward.5} parent=0 // pred_check
    _
  $region7: #{causal_self_attention_forward.5} parent=0 // pred_check_branch
    %10 = sbr.rel (0) target = $region9
  $region8: #{causal_self_attention_forward.5} parent=0 // pred_region
    _
  $region9: #{causal_self_attention_forward.5} parent=0 // pred_fallthru
    _
  %p12 = scmp.eq.s32.totalorder 0, 0
  // Predicated region
  $region10: #{causal_self_attention_forward.5} parent=0 // pred_check
    %p13 = pneg %p12
  $region11: #{causal_self_attention_forward.5} parent=0 // pred_check_branch
    %15 = sbr.rel (%p13) target = $region13
  $region12: #{causal_self_attention_forward.5} parent=0 // pred_region
    %16 = vst [vmem:[#allocation2] sm:$0xff] 0.0
    %17 = vst [vmem:[#allocation2 + $0x8] sm:$0xff] 0.0
  $region13: #{causal_self_attention_forward.5} parent=0 // pred_fallthru
    _
  %v18 = vld [vmem:[#allocation2] sm:$0xff]
  %v19 = vld [vmem:[#allocation2 + $0x8] sm:$0xff]
  %v20 = vld [vmem:[%s0] sm:$0xf]
  %v21 = vld [vmem:[%s0 + $0x4] sm:$0xf]
  %v22 = vld [vmem:[%s1] sm:$0xf]
  %v23 = vld [vmem:[%s1 + $0x4] sm:$0xf]
  %v24 = vld [vmem:[%s1 + $0x8] sm:$0xf]
  %v25 = vld [vmem:[%s1 + $0xc] sm:$0xf]
  %v26 = vld [vmem:[%s1 + $0x10] sm:$0xf]
  %v27 = vld [vmem:[%s1 + $0x14] sm:$0xf]
  %v28 = vld [vmem:[%s1 + $0x18] sm:$0xf]
  %v29 = vld [vmem:[%s1 + $0x1c] sm:$0xf]
  %v30 = vld [vmem:[%s1 + $0x20] sm:$0xf]
  %v31 = vld [vmem:[%s1 + $0x24] sm:$0xf]
  %v32 = vld [vmem:[%s1 + $0x28] sm:$0xf]
  %v33 = vld [vmem:[%s1 + $0x2c] sm:$0xf]
  %v34 = vld [vmem:[%s1 + $0x30] sm:$0xf]
  %v35 = vld [vmem:[%s1 + $0x34] sm:$0xf]
  %v36 = vld [vmem:[%s1 + $0x38] sm:$0xf]
  %v37 = vld [vmem:[%s1 + $0x3c] sm:$0xf]
  %v40 = vunpack.c.l.b16 %v20
  %v41 = vunpack.c.l.b16 %v21
  %v42 = vpack.c.b16 %v41, %v40
  %v60 = vunpack.c.l.b16 %v22
  %v61 = vunpack.c.l.b16 %v23
  %v62 = vunpack.c.l.b16 %v24
  %v63 = vunpack.c.l.b16 %v25
  %v64 = vunpack.c.l.b16 %v26
  %v65 = vunpack.c.l.b16 %v27
  %v66 = vunpack.c.l.b16 %v28
  %v67 = vunpack.c.l.b16 %v29
  %v68 = vunpack.c.l.b16 %v30
  %v69 = vunpack.c.l.b16 %v31
  %v70 = vunpack.c.l.b16 %v32
  %v71 = vunpack.c.l.b16 %v33
  %v72 = vunpack.c.l.b16 %v34
  %v73 = vunpack.c.l.b16 %v35
  %v74 = vunpack.c.l.b16 %v36
  %v75 = vunpack.c.l.b16 %v37
  %v76 = vpack.c.b16 %v61, %v60
  %v77 = vpack.c.b16 %v63, %v62
  %v78 = vpack.c.b16 %v65, %v64
  %v79 = vpack.c.b16 %v67, %v66
  %v80 = vpack.c.b16 %v69, %v68
  %v81 = vpack.c.b16 %v71, %v70
  %v82 = vpack.c.b16 %v73, %v72
  %v83 = vpack.c.b16 %v75, %v74
  %92 = vmatprep.subr.bf16.mxu0 0
  %93 = vmatpush1.bf16.msra.mxu0 %v76
  %94 = vmatprep.subr.bf16.mxu0 0
  %95 = vmatpush1.bf16.msra.mxu0 %v77
  %96 = vmatprep.subr.bf16.mxu0 0
  %97 = vmatpush1.bf16.msra.mxu0 %v78
  %98 = vmatprep.subr.bf16.mxu0 0
  %99 = vmatpush1.bf16.msra.mxu0 %v79
  %100 = vmatprep.subr.bf16.mxu0 0
  %101 = vmatpush1.bf16.msra.mxu0 %v80
  %102 = vmatprep.subr.bf16.mxu0 0
  %103 = vmatpush1.bf16.msra.mxu0 %v81
  %104 = vmatprep.subr.bf16.mxu0 0
  %105 = vmatpush1.bf16.msra.mxu0 %v82
  %106 = vmatprep.subr.bf16.mxu0 0
  %107 = vmatpush1.bf16.msra.mxu0 %v83
  %108 = vmatprep.subr.bf16.mxu0 0
  %109 = vmatpush1.bf16.msra.mxu0 0
  %110 = vmatprep.subr.bf16.mxu0 0
  %111 = vmatpush1.bf16.msra.mxu0 0
  %112 = vmatprep.subr.bf16.mxu0 0
  %113 = vmatpush1.bf16.msra.mxu0 0
  %114 = vmatprep.subr.bf16.mxu0 0
  %115 = vmatpush1.bf16.msra.mxu0 0
  %116 = vmatprep.subr.bf16.mxu0 0
  %117 = vmatpush1.bf16.msra.mxu0 0
  %118 = vmatprep.subr.bf16.mxu0 0
  %119 = vmatpush1.bf16.msra.mxu0 0
  %120 = vmatprep.subr.bf16.mxu0 0
  %121 = vmatpush1.bf16.msra.mxu0 0
  %122 = vmatprep.subr.bf16.mxu0 0
  %123 = vmatpush1.bf16.msra.mxu0 0
  %124 = vmatprep.mubr.bf16.mxu0 0
  %125 = vmatmul.mubr.bf16.gmra.mrb[0].mxu0 %v42
  %v126 = vpop.f32.mrb[0].mxu0
  %v127 = vadd.f32 0.0, %v126
  %v128 = vpop.f32.mrb[0].mxu0
  %v129 = vpop.f32.mrb[0].mxu0
  %v130 = vadd.f32 0.0, %v129
  %v131 = vpop.f32.mrb[0].mxu0
  %132 = vdwg.mxu0
  %v133 = vadd.f32 %v18, %v127
  %v134 = vadd.f32 %v19, %v130
  %135 = vst [vmem:[#allocation2] sm:$0xff] %v133
  %136 = vst [vmem:[#allocation2 + $0x8] sm:$0xff] %v134
  // Predicated region
  $region14: #{causal_self_attention_forward.5} parent=0 // pred_check
    %p137 = pneg %p12
  $region15: #{causal_self_attention_forward.5} parent=0 // pred_check_branch
    %139 = sbr.rel (%p137) target = $region17
  $region16: #{causal_self_attention_forward.5} parent=0 // pred_region
    %v140 = vld [vmem:[#allocation2] sm:$0xff]
    %v141 = vld [vmem:[#allocation2 + $0x8] sm:$0xff]
    %142 = vst [vmem:[%s2] sm:$0xff] %v140
    %143 = vst [vmem:[%s2 + $0x8] sm:$0xff] %v141
  $region17: #{causal_self_attention_forward.5} parent=0 // pred_fallthru
    _
  // Predicated region
  $region18: #{causal_self_attention_forward.5} parent=0 // pred_check
    _
  $region19: #{causal_self_attention_forward.5} parent=0 // pred_check_branch
    %145 = sbr.rel (0) target = $region21
  $region20: #{causal_self_attention_forward.5} parent=0 // pred_region
    _
  $region21: #{causal_self_attention_forward.5} parent=0 // pred_fallthru
    _
  // Predicated region
  $region22: #{causal_self_attention_forward.5} parent=0 // pred_check
    _
  $region23: #{causal_self_attention_forward.5} parent=0 // pred_check_branch
    %147 = sbr.rel (0) target = $region25
  $region24: #{causal_self_attention_forward.5} parent=0 // pred_region
    _
  $region25: #{causal_self_attention_forward.5} parent=0 // pred_fallthru
    _

// kernel: causal_self_attention_forward.3
$region0: #{causal_self_attention_forward.3}
  #allocation0 [shape = 'u32[]', space=smem, size = 0x4, offset = 0x4, fixed_abs, tag = 'smem constant byte address 0x4 - core index']
  #allocation1 [shape = 'u32[144,128]{1,0:T(1,128)}', space=vmem, size = 0x12000, scoped, tag = 'internal scratch']
  #allocation2 [shape = 'f32[8,384]{1,0:T(8,128)}', space=vmem, size = 0x3000, scoped, tag = 'scratch operand']
  %s0 = inlined_call_operand.vmem [shape: f32[2,8,128], index: 0, kind: input, shape index: {}]
  %s1 = inlined_call_operand.vmem [shape: bf16[128,384], index: 1, kind: input, shape index: {}]
  %s2 = inlined_call_operand.vmem [shape: f32[8,128], index: 2, kind: input, shape index: {}]
  %s3 = inlined_call_operand.vmem [shape: f32[8,128], index: 3, kind: input, shape index: {}]
  %s4 = inlined_call_operand.vmem [shape: bf16[2,8,384], index: 4, kind: output, shape index: {}]
  %s5 = sld [smem:[#allocation0]]
  $region57: #{causal_self_attention_forward.3} parent=0
    _
  %s7 = ssub.s32 1, %s5
  %s8 = scalar_select 0, %s7, %s5
  loop: start=0, step=1, limit=4
  $region2: #{causal_self_attention_forward.3} parent=0 // loop_pre_header
    _
  $region3: #{causal_self_attention_forward.3} parent=0 // loop_header
    %s10 = sphi 0, %s14
    %p11 = scmp.ge.s32.totalorder %s10, 4
    %s17 = sphi 0, %s36
    %s18 = sphi 0, %s32
    %s19 = sphi 0, %s28
    %s20 = sphi 0, %s17
    %s21 = sphi 0, %s18
    %s22 = sphi 0, %s19
    %s23 = sphi 0, %s20
    %s24 = sphi 0, %s21
    %s25 = sphi 0, %s22
    %s43 = sphi 0, %s45
    %s46 = sphi 0, %s43
    %s47 = sphi 0, %s46
    %s63 = sphi 0, %s47
    %s69 = sphi 0, %s71
    %s72 = sphi 0, %s69
    %s73 = sphi 0, %s72
    %s89 = sphi 0, %s73
    %s95 = sphi 0, %s97
    %s98 = sphi 0, %s95
    %s99 = sphi 0, %s98
    %s115 = sphi 0, %s99
    %s121 = sphi 0, %s123
    %s124 = sphi 0, %s121
    %s125 = sphi 0, %s124
    %s141 = sphi 0, %s125
    %s149 = sphi 0, %s151
    %s152 = sphi 0, %s149
    %s153 = sphi 0, %s152
    %s169 = sphi 0, %s153
  $region4: #{causal_self_attention_forward.3} parent=0 // loop_header_branch
    %13 = sbr.rel (%p11) target = $region8
  $region5: #{causal_self_attention_forward.3} parent=0 // loop_body
    %s15 = ssub.s32 %s10, 1
    %s16 = ssub.s32 %s10, 2
    %s26 = sadd.s32 1, %s19
    %p27 = scmp.ge.s32.totalorder %s26, 1
    %s28 = scalar_select %p27, 0, %s26
    %s29 = sadd.s32 1, %s18
    %s30 = scalar_select %p27, %s29, %s18
    %p31 = scmp.ge.s32.totalorder %s30, 1
    %s32 = scalar_select %p31, 0, %s30
    %s33 = sadd.s32 1, %s17
    %s34 = scalar_select %p31, %s33, %s17
    %p35 = scmp.ge.s32.totalorder %s34, 2
    %s36 = scalar_select %p35, 0, %s34
    %s37 = ssub.s32 %s17, %s36
    %s38 = ssub.s32 %s18, %s32
    %s39 = sor.u32 %s37, %s38
    %s40 = ssub.s32 %s19, %s28
    %s41 = sor.u32 %s39, %s40
    %p42 = scmp.eq.s32.totalorder %s41, 0
    %s44 = sadd.s32 %s43, 1
    %s45 = scalar_select %p42, %s43, %s44
    %p48 = pneg %p42
    %p49 = scmp.eq.s32.totalorder %s10, 1
    %p50 = por %p48, %p49
    %p51 = scmp.ne.s32.totalorder %s43, %s46
    %p52 = scmp.eq.s32.totalorder %s10, 0
    %p53 = por %p51, %p52
    %p54 = scmp.ne.s32.totalorder %s43, %s46
    %p55 = scmp.eq.s32.totalorder %s15, 1
    %p56 = por %p54, %p55
    %p57 = scmp.ne.s32.totalorder %s46, %s47
    %p58 = scmp.eq.s32.totalorder %s15, 0
    %p59 = por %p57, %p58
    %p60 = scmp.ne.s32.totalorder %s46, %s47
    %p61 = scmp.eq.s32.totalorder %s16, 1
    %p62 = por %p60, %p61
    %p64 = scmp.ne.s32.totalorder %s47, %s63
    %p65 = scmp.eq.s32.totalorder %s16, 0
    %p66 = por %p64, %p65
    %s67 = ssub.s32 %s19, %s28
    %p68 = scmp.eq.s32.totalorder %s67, 0
    %s70 = sadd.s32 %s69, 1
    %s71 = scalar_select %p68, %s69, %s70
    %p74 = pneg %p68
    %p75 = scmp.eq.s32.totalorder %s10, 1
    %p76 = por %p74, %p75
    %p77 = scmp.ne.s32.totalorder %s69, %s72
    %p78 = scmp.eq.s32.totalorder %s10, 0
    %p79 = por %p77, %p78
    %p80 = scmp.ne.s32.totalorder %s69, %s72
    %p81 = scmp.eq.s32.totalorder %s15, 1
    %p82 = por %p80, %p81
    %p83 = scmp.ne.s32.totalorder %s72, %s73
    %p84 = scmp.eq.s32.totalorder %s15, 0
    %p85 = por %p83, %p84
    %p86 = scmp.ne.s32.totalorder %s72, %s73
    %p87 = scmp.eq.s32.totalorder %s16, 1
    %p88 = por %p86, %p87
    %p90 = scmp.ne.s32.totalorder %s73, %s89
    %p91 = scmp.eq.s32.totalorder %s16, 0
    %p92 = por %p90, %p91
    %s93 = ssub.s32 %s18, %s32
    %p94 = scmp.eq.s32.totalorder %s93, 0
    %s96 = sadd.s32 %s95, 1
    %s97 = scalar_select %p94, %s95, %s96
    %p100 = pneg %p94
    %p101 = scmp.eq.s32.totalorder %s10, 1
    %p102 = por %p100, %p101
    %p103 = scmp.ne.s32.totalorder %s95, %s98
    %p104 = scmp.eq.s32.totalorder %s10, 0
    %p105 = por %p103, %p104
    %p106 = scmp.ne.s32.totalorder %s95, %s98
    %p107 = scmp.eq.s32.totalorder %s15, 1
    %p108 = por %p106, %p107
    %p109 = scmp.ne.s32.totalorder %s98, %s99
    %p110 = scmp.eq.s32.totalorder %s15, 0
    %p111 = por %p109, %p110
    %p112 = scmp.ne.s32.totalorder %s98, %s99
    %p113 = scmp.eq.s32.totalorder %s16, 1
    %p114 = por %p112, %p113
    %p116 = scmp.ne.s32.totalorder %s99, %s115
    %p117 = scmp.eq.s32.totalorder %s16, 0
    %p118 = por %p116, %p117
    %s119 = ssub.s32 %s18, %s32
    %p120 = scmp.eq.s32.totalorder %s119, 0
    %s122 = sadd.s32 %s121, 1
    %s123 = scalar_select %p120, %s121, %s122
    %p126 = pneg %p120
    %p127 = scmp.eq.s32.totalorder %s10, 1
    %p128 = por %p126, %p127
    %p129 = scmp.ne.s32.totalorder %s121, %s124
    %p130 = scmp.eq.s32.totalorder %s10, 0
    %p131 = por %p129, %p130
    %p132 = scmp.ne.s32.totalorder %s121, %s124
    %p133 = scmp.eq.s32.totalorder %s15, 1
    %p134 = por %p132, %p133
    %p135 = scmp.ne.s32.totalorder %s124, %s125
    %p136 = scmp.eq.s32.totalorder %s15, 0
    %p137 = por %p135, %p136
    %p138 = scmp.ne.s32.totalorder %s124, %s125
    %p139 = scmp.eq.s32.totalorder %s16, 1
    %p140 = por %p138, %p139
    %p142 = scmp.ne.s32.totalorder %s125, %s141
    %p143 = scmp.eq.s32.totalorder %s16, 0
    %p144 = por %p142, %p143
    %s145 = ssub.s32 %s17, %s36
    %s146 = ssub.s32 %s18, %s32
    %s147 = sor.u32 %s145, %s146
    %p148 = scmp.eq.s32.totalorder %s147, 0
    %s150 = sadd.s32 %s149, 1
    %s151 = scalar_select %p148, %s149, %s150
    %p154 = pneg %p148
    %p155 = scmp.eq.s32.totalorder %s10, 1
    %p156 = por %p154, %p155
    %p157 = scmp.ne.s32.totalorder %s149, %s152
    %p158 = scmp.eq.s32.totalorder %s10, 0
    %p159 = por %p157, %p158
    %p160 = scmp.ne.s32.totalorder %s149, %s152
    %p161 = scmp.eq.s32.totalorder %s15, 1
    %p162 = por %p160, %p161
    %p163 = scmp.ne.s32.totalorder %s152, %s153
    %p164 = scmp.eq.s32.totalorder %s15, 0
    %p165 = por %p163, %p164
    %p166 = scmp.ne.s32.totalorder %s152, %s153
    %p167 = scmp.eq.s32.totalorder %s16, 1
    %p168 = por %p166, %p167
    %p170 = scmp.ne.s32.totalorder %s153, %s169
    %p171 = scmp.eq.s32.totalorder %s16, 0
    %p172 = por %p170, %p171
    %p173 = scmp.le.s32.totalorder 1, %s10
    %p174 = scmp.lt.s32.totalorder %s10, 3
    %p175 = pnand %p173, %p174
    %p176 = pneg %p175
    // Predicated region
    $region9: #{causal_self_attention_forward.3} parent=5 // pred_check
      _
    $region10: #{causal_self_attention_forward.3} parent=5 // pred_check_branch
      %178 = sbr.rel (%p175) target = $region12
    $region11: #{causal_self_attention_forward.3} parent=5 // pred_region
      %s179 = ssub.s32 %s10, 1
      // Predicated region
      $region13: #{causal_self_attention_forward.3} parent=11 // pred_check
        %p180 = pneg %p85
      $region14: #{causal_self_attention_forward.3} parent=11 // pred_check_branch
        %182 = sbr.rel (%p180) target = $region16
      $region15: #{causal_self_attention_forward.3} parent=11 // pred_region
        %s183 = smul.u32 16, %s22
        %p184 = scmp.lt.s32.totalorder %s183, 15
        %s185 = scalar_select %p184, %s183, 15
        %s186 = smul.addr %s185, 3
        %s187 = smul.addr %s186, 4
        %s188 = scalar_lea.vmem %s1, %s187
        %s189 = smul.u32 16, %s22
      $region16: #{causal_self_attention_forward.3} parent=11 // pred_fallthru
        _
      // Predicated region
      $region17: #{causal_self_attention_forward.3} parent=11 // pred_check
        %p190 = pneg %p111
      $region18: #{causal_self_attention_forward.3} parent=11 // pred_check_branch
        %192 = sbr.rel (%p190) target = $region20
      $region19: #{causal_self_attention_forward.3} parent=11 // pred_region
        %p193 = scmp.lt.s32.totalorder %s21, 0
        %s194 = scalar_select %p193, %s21, 0
        %s195 = smul.addr %s194, 8
        %s196 = scalar_lea.vmem %s2, %s195
      $region20: #{causal_self_attention_forward.3} parent=11 // pred_fallthru
        _
      // Predicated region
      $region21: #{causal_self_attention_forward.3} parent=11 // pred_check
        %p197 = pneg %p137
      $region22: #{causal_self_attention_forward.3} parent=11 // pred_check_branch
        %199 = sbr.rel (%p197) target = $region24
      $region23: #{causal_self_attention_forward.3} parent=11 // pred_region
        %p200 = scmp.lt.s32.totalorder %s21, 0
        %s201 = scalar_select %p200, %s21, 0
        %s202 = smul.addr %s201, 8
        %s203 = scalar_lea.vmem %s3, %s202
      $region24: #{causal_self_attention_forward.3} parent=11 // pred_fallthru
        _
    $region12: #{causal_self_attention_forward.3} parent=5 // pred_fallthru
      _
    %p204 = scmp.lt.s32.totalorder %s10, 2
    // Predicated region
    $region25: #{causal_self_attention_forward.3} parent=5 // pred_check
      %p205 = pneg %p204
    $region26: #{causal_self_attention_forward.3} parent=5 // pred_check_branch
      %207 = sbr.rel (%p205) target = $region28
    $region27: #{causal_self_attention_forward.3} parent=5 // pred_region
      // Predicated region
      $region29: #{causal_self_attention_forward.3} parent=27 // pred_check
        %p208 = pneg %p53
      $region30: #{causal_self_attention_forward.3} parent=27 // pred_check_branch
        %210 = sbr.rel (%p208) target = $region32
      $region31: #{causal_self_attention_forward.3} parent=27 // pred_region
        %p211 = scmp.lt.s32.totalorder %s17, 1
        %s212 = scalar_select %p211, %s17, 1
        %p213 = scmp.lt.s32.totalorder %s18, 0
        %s214 = scalar_select %p213, %s18, 0
        %p215 = scmp.lt.s32.totalorder %s19, 0
        %s216 = scalar_select %p215, %s19, 0
        %s217 = sadd.s32 %s216, %s214
        %s218 = sadd.s32 %s217, %s212
        %s219 = smul.addr %s218, 8
        %s220 = scalar_lea.vmem %s0, %s219
      $region32: #{causal_self_attention_forward.3} parent=27 // pred_fallthru
        _
    $region28: #{causal_self_attention_forward.3} parent=5 // pred_fallthru
      _
    %p221 = scmp.le.s32.totalorder 1, %s10
    %p222 = scmp.lt.s32.totalorder %s10, 3
    %p223 = pnand %p221, %p222
    %p224 = pneg %p223
    // Predicated region
    $region33: #{causal_self_attention_forward.3} parent=5 // pred_check
      _
    $region34: #{causal_self_attention_forward.3} parent=5 // pred_check_branch
      %226 = sbr.rel (%p223) target = $region36
    $region35: #{causal_self_attention_forward.3} parent=5 // pred_region
      %s227 = ssub.s32 %s10, 1
      %p228 = scmp.lt.s32.totalorder %s20, 1
      %s229 = scalar_select %p228, %s20, 1
      %p230 = scmp.lt.s32.totalorder %s21, 0
      %s231 = scalar_select %p230, %s21, 0
      %p232 = scmp.lt.s32.totalorder %s22, 0
      %s233 = scalar_select %p232, %s22, 0
      %s234 = sadd.s32 %s233, %s231
      %s235 = sadd.s32 %s234, %s229
      %s236 = smul.addr %s235, 8
      %s237 = scalar_lea.vmem %s0, %s236
      %p238 = pneg %p59
      %p239 = pneg %p56
      %s240 = smul.u32 16, %s22
      %p241 = scmp.lt.s32.totalorder %s240, 15
      %s242 = scalar_select %p241, %s240, 15
      %s243 = smul.addr %s242, 3
      %s244 = smul.addr %s243, 4
      %s245 = scalar_lea.vmem %s1, %s244
      %p246 = pneg %p85
      %p247 = pneg %p82
      %p248 = scmp.lt.s32.totalorder %s21, 0
      %s249 = scalar_select %p248, %s21, 0
      %s250 = smul.addr %s249, 8
      %s251 = scalar_lea.vmem %s2, %s250
      %p252 = pneg %p111
      %p253 = pneg %p108
      %p254 = scmp.lt.s32.totalorder %s21, 0
      %s255 = scalar_select %p254, %s21, 0
      %s256 = smul.addr %s255, 8
      %s257 = scalar_lea.vmem %s3, %s256
      %p258 = pneg %p137
      %p259 = pneg %p134
      %p260 = pneg %p165
      %p261 = pneg %p162
      %p262 = scmp.lt.s32.totalorder %s20, 1
      %s263 = scalar_select %p262, %s20, 1
      %p264 = scmp.lt.s32.totalorder %s21, 0
      %s265 = scalar_select %p264, %s21, 0
      %s266 = smul.addr %s265, 3
      %s267 = smul.addr %s263, 3
      %s268 = sadd.s32 %s266, %s267
      %s269 = smul.addr %s268, 4
      %s270 = scalar_lea.vmem %s4, %s269
      %p271 = scmp.lt.s32.totalorder %s20, 1
      %s272 = scalar_select %p271, %s20, 1
      %p273 = scmp.lt.s32.totalorder %s21, 0
      %s274 = scalar_select %p273, %s21, 0
      %p275 = scmp.lt.s32.totalorder %s22, 0
      %s276 = scalar_select %p275, %s22, 0
      %s277 = sadd.s32 %s276, %s274
      %s278 = sadd.s32 %s277, %s272
      %s279 = smul.addr %s278, 8
      %s280 = scalar_lea.vmem %s0, %s279
      %s281 = smul.u32 16, %s22
      %p282 = scmp.lt.s32.totalorder %s281, 15
      %s283 = scalar_select %p282, %s281, 15
      %s284 = smul.addr %s283, 3
      %s285 = smul.addr %s284, 4
      %s286 = scalar_lea.vmem %s1, %s285
      %s287 = smul.u32 16, %s22
      %p288 = scmp.lt.s32.totalorder %s21, 0
      %s289 = scalar_select %p288, %s21, 0
      %s290 = smul.addr %s289, 8
      %s291 = scalar_lea.vmem %s2, %s290
      %p292 = scmp.lt.s32.totalorder %s21, 0
      %s293 = scalar_select %p292, %s21, 0
      %s294 = smul.addr %s293, 8
      %s295 = scalar_lea.vmem %s3, %s294
      %p296 = scmp.lt.s32.totalorder %s20, 1
      %s297 = scalar_select %p296, %s20, 1
      %p298 = scmp.lt.s32.totalorder %s21, 0
      %s299 = scalar_select %p298, %s21, 0
      %s300 = smul.addr %s299, 3
      %s301 = smul.addr %s297, 3
      %s302 = sadd.s32 %s300, %s301
      %s303 = smul.addr %s302, 4
      %s304 = scalar_lea.vmem %s4, %s303
      %p306 = scmp.eq.s32.totalorder %s22, 0
      // Predicated region
      $region37: #{causal_self_attention_forward.3} parent=35 // pred_check
        %p307 = pneg %p306
      $region38: #{causal_self_attention_forward.3} parent=35 // pred_check_branch
        %309 = sbr.rel (%p307) target = $region40
      $region39: #{causal_self_attention_forward.3} parent=35 // pred_region
        %310 = vst [vmem:[#allocation2] sm:$0xff] 0.0
        %311 = vst [vmem:[#allocation2 + $0x8] sm:$0xff] 0.0
        %312 = vst [vmem:[#allocation2 + $0x10] sm:$0xff] 0.0
      $region40: #{causal_self_attention_forward.3} parent=35 // pred_fallthru
        _
      %v313 = vld [vmem:[#allocation2] sm:$0xff]
      %v314 = vld [vmem:[#allocation2 + $0x8] sm:$0xff]
      %v315 = vld [vmem:[#allocation2 + $0x10] sm:$0xff]
      %v316 = vld [vmem:[%s280] sm:$0xff]
      %v317 = vpack.c.bf16 %v316, %v316
      %v318 = vld [vmem:[%s286] sm:$0xff]
      %v319 = vld [vmem:[%s286 + $0x8] sm:$0xf]
      %v320 = vld [vmem:[%s286 + $0xc] sm:$0xff]
      %v321 = vld [vmem:[%s286 + $0x14] sm:$0xf]
      %v322 = vld [vmem:[%s286 + $0x18] sm:$0xff]
      %v323 = vld [vmem:[%s286 + $0x20] sm:$0xf]
      %v324 = vld [vmem:[%s286 + $0x24] sm:$0xff]
      %v325 = vld [vmem:[%s286 + $0x2c] sm:$0xf]
      %v326 = vld [vmem:[%s286 + $0x30] sm:$0xff]
      %v327 = vld [vmem:[%s286 + $0x38] sm:$0xf]
      %v328 = vld [vmem:[%s286 + $0x3c] sm:$0xff]
      %v329 = vld [vmem:[%s286 + $0x44] sm:$0xf]
      %v330 = vld [vmem:[%s286 + $0x48] sm:$0xff]
      %v331 = vld [vmem:[%s286 + $0x50] sm:$0xf]
      %v332 = vld [vmem:[%s286 + $0x54] sm:$0xff]
      %v333 = vld [vmem:[%s286 + $0x5c] sm:$0xf]
      %v334 = vld [vmem:[%s286 + $0x60] sm:$0xff]
      %v335 = vld [vmem:[%s286 + $0x68] sm:$0xf]
      %v336 = vld [vmem:[%s286 + $0x6c] sm:$0xff]
      %v337 = vld [vmem:[%s286 + $0x74] sm:$0xf]
      %v338 = vld [vmem:[%s286 + $0x78] sm:$0xff]
      %v339 = vld [vmem:[%s286 + $0x80] sm:$0xf]
      %v340 = vld [vmem:[%s286 + $0x84] sm:$0xff]
      %v341 = vld [vmem:[%s286 + $0x8c] sm:$0xf]
      %v342 = vld [vmem:[%s286 + $0x90] sm:$0xff]
      %v343 = vld [vmem:[%s286 + $0x98] sm:$0xf]
      %v344 = vld [vmem:[%s286 + $0x9c] sm:$0xff]
      %v345 = vld [vmem:[%s286 + $0xa4] sm:$0xf]
      %v346 = vld [vmem:[%s286 + $0xa8] sm:$0xff]
      %v347 = vld [vmem:[%s286 + $0xb0] sm:$0xf]
      %v348 = vld [vmem:[%s286 + $0xb4] sm:$0xff]
      %v349 = vld [vmem:[%s286 + $0xbc] sm:$0xf]
      %v382 = vunpack.c.l.b16 %v318
      %v383 = vunpack.c.h.b16 %v318
      %v384 = vunpack.c.l.b16 %v319
      %v385 = vunpack.c.l.b16 %v320
      %v386 = vunpack.c.h.b16 %v320
      %v387 = vunpack.c.l.b16 %v321
      %v388 = vunpack.c.l.b16 %v322
      %v389 = vunpack.c.h.b16 %v322
      %v390 = vunpack.c.l.b16 %v323
      %v391 = vunpack.c.l.b16 %v324
      %v392 = vunpack.c.h.b16 %v324
      %v393 = vunpack.c.l.b16 %v325
      %v394 = vunpack.c.l.b16 %v326
      %v395 = vunpack.c.h.b16 %v326
      %v396 = vunpack.c.l.b16 %v327
      %v397 = vunpack.c.l.b16 %v328
      %v398 = vunpack.c.h.b16 %v328
      %v399 = vunpack.c.l.b16 %v329
      %v400 = vunpack.c.l.b16 %v330
      %v401 = vunpack.c.h.b16 %v330
      %v402 = vunpack.c.l.b16 %v331
      %v403 = vunpack.c.l.b16 %v332
      %v404 = vunpack.c.h.b16 %v332
      %v405 = vunpack.c.l.b16 %v333
      %v406 = vunpack.c.l.b16 %v334
      %v407 = vunpack.c.h.b16 %v334
      %v408 = vunpack.c.l.b16 %v335
      %v409 = vunpack.c.l.b16 %v336
      %v410 = vunpack.c.h.b16 %v336
      %v411 = vunpack.c.l.b16 %v337
      %v412 = vunpack.c.l.b16 %v338
      %v413 = vunpack.c.h.b16 %v338
      %v414 = vunpack.c.l.b16 %v339
      %v415 = vunpack.c.l.b16 %v340
      %v416 = vunpack.c.h.b16 %v340
      %v417 = vunpack.c.l.b16 %v341
      %v418 = vunpack.c.l.b16 %v342
      %v419 = vunpack.c.h.b16 %v342
      %v420 = vunpack.c.l.b16 %v343
      %v421 = vunpack.c.l.b16 %v344
      %v422 = vunpack.c.h.b16 %v344
      %v423 = vunpack.c.l.b16 %v345
      %v424 = vunpack.c.l.b16 %v346
      %v425 = vunpack.c.h.b16 %v346
      %v426 = vunpack.c.l.b16 %v347
      %v427 = vunpack.c.l.b16 %v348
      %v428 = vunpack.c.h.b16 %v348
      %v429 = vunpack.c.l.b16 %v349
      %v430 = vpack.c.b16 %v385, %v382
      %v431 = vpack.c.b16 %v386, %v383
      %v432 = vpack.c.b16 %v387, %v384
      %v433 = vpack.c.b16 %v391, %v388
      %v434 = vpack.c.b16 %v392, %v389
      %v435 = vpack.c.b16 %v393, %v390
      %v436 = vpack.c.b16 %v397, %v394
      %v437 = vpack.c.b16 %v398, %v395
      %v438 = vpack.c.b16 %v399, %v396
      %v439 = vpack.c.b16 %v403, %v400
      %v440 = vpack.c.b16 %v404, %v401
      %v441 = vpack.c.b16 %v405, %v402
      %v442 = vpack.c.b16 %v409, %v406
      %v443 = vpack.c.b16 %v410, %v407
      %v444 = vpack.c.b16 %v411, %v408
      %v445 = vpack.c.b16 %v415, %v412
      %v446 = vpack.c.b16 %v416, %v413
      %v447 = vpack.c.b16 %v417, %v414
      %v448 = vpack.c.b16 %v421, %v418
      %v449 = vpack.c.b16 %v422, %v419
      %v450 = vpack.c.b16 %v423, %v420
      %v451 = vpack.c.b16 %v427, %v424
      %v452 = vpack.c.b16 %v428, %v425
      %v453 = vpack.c.b16 %v429, %v426
      %478 = vmatprep.subr.bf16.mxu0 %v431
      %479 = vmatpush1.bf16.msra.mxu0 %v430
      %480 = vmatprep.subr.bf16.mxu0 %v434
      %481 = vmatpush1.bf16.msra.mxu0 %v433
      %482 = vmatprep.subr.bf16.mxu0 %v437
      %483 = vmatpush1.bf16.msra.mxu0 %v436
      %484 = vmatprep.subr.bf16.mxu0 %v440
      %485 = vmatpush1.bf16.msra.mxu0 %v439
      %486 = vmatprep.subr.bf16.mxu0 %v443
      %487 = vmatpush1.bf16.msra.mxu0 %v442
      %488 = vmatprep.subr.bf16.mxu0 %v446
      %489 = vmatpush1.bf16.msra.mxu0 %v445
      %490 = vmatprep.subr.bf16.mxu0 %v449
      %491 = vmatpush1.bf16.msra.mxu0 %v448
      %492 = vmatprep.subr.bf16.mxu0 %v452
      %493 = vmatpush1.bf16.msra.mxu0 %v451
      %494 = vmatprep.subr.bf16.mxu0 0
      %495 = vmatpush1.bf16.msra.mxu0 0
      %496 = vmatprep.subr.bf16.mxu0 0
      %497 = vmatpush1.bf16.msra.mxu0 0
      %498 = vmatprep.subr.bf16.mxu0 0
      %499 = vmatpush1.bf16.msra.mxu0 0
      %500 = vmatprep.subr.bf16.mxu0 0
      %501 = vmatpush1.bf16.msra.mxu0 0
      %502 = vmatprep.subr.bf16.mxu0 0
      %503 = vmatpush1.bf16.msra.mxu0 0
      %504 = vmatprep.subr.bf16.mxu0 0
      %505 = vmatpush1.bf16.msra.mxu0 0
      %506 = vmatprep.subr.bf16.mxu0 0
      %507 = vmatpush1.bf16.msra.mxu0 0
      %508 = vmatprep.subr.bf16.mxu0 0
      %509 = vmatpush1.bf16.msra.mxu0 0
      %510 = vmatprep.mubr.bf16.mxu0 0
      %511 = vmatmul.mubr.bf16.gmra.mrb[0].mxu0 %v317
      %v512 = vpop.f32.mrb[0].mxu0
      %v513 = vadd.f32 0.0, %v512
      %v514 = vpop.f32.mrb[0].mxu0
      %v515 = vadd.f32 0.0, %v514
      %v516 = vpop.f32.mrb[0].mxu0
      %v517 = vpop.f32.mrb[0].mxu0
      %518 = vdwg.mxu0
      %519 = vmatprep.subr.bf16.mxu0 0
      %520 = vmatpush1.bf16.msra.mxu0 %v432
      %521 = vmatprep.subr.bf16.mxu0 0
      %522 = vmatpush1.bf16.msra.mxu0 %v435
      %523 = vmatprep.subr.bf16.mxu0 0
      %524 = vmatpush1.bf16.msra.mxu0 %v438
      %525 = vmatprep.subr.bf16.mxu0 0
      %526 = vmatpush1.bf16.msra.mxu0 %v441
      %527 = vmatprep.subr.bf16.mxu0 0
      %528 = vmatpush1.bf16.msra.mxu0 %v444
      %529 = vmatprep.subr.bf16.mxu0 0
      %530 = vmatpush1.bf16.msra.mxu0 %v447
      %531 = vmatprep.subr.bf16.mxu0 0
      %532 = vmatpush1.bf16.msra.mxu0 %v450
      %533 = vmatprep.subr.bf16.mxu0 0
      %534 = vmatpush1.bf16.msra.mxu0 %v453
      %535 = vmatprep.subr.bf16.mxu0 0
      %536 = vmatpush1.bf16.msra.mxu0 0
      %537 = vmatprep.subr.bf16.mxu0 0
      %538 = vmatpush1.bf16.msra.mxu0 0
      %539 = vmatprep.subr.bf16.mxu0 0
      %540 = vmatpush1.bf16.msra.mxu0 0
      %541 = vmatprep.subr.bf16.mxu0 0
      %542 = vmatpush1.bf16.msra.mxu0 0
      %543 = vmatprep.subr.bf16.mxu0 0
      %544 = vmatpush1.bf16.msra.mxu0 0
      %545 = vmatprep.subr.bf16.mxu0 0
      %546 = vmatpush1.bf16.msra.mxu0 0
      %547 = vmatprep.subr.bf16.mxu0 0
      %548 = vmatpush1.bf16.msra.mxu0 0
      %549 = vmatprep.subr.bf16.mxu0 0
      %550 = vmatpush1.bf16.msra.mxu0 0
      %551 = vmatprep.mubr.bf16.mxu0 0
      %552 = vmatmul.mubr.bf16.gmra.mrb[0].mxu0 %v317
      %v553 = vpop.f32.mrb[0].mxu0
      %v554 = vadd.f32 0.0, %v553
      %v555 = vpop.f32.mrb[0].mxu0
      %v556 = vpop.f32.mrb[0].mxu0
      %v557 = vpop.f32.mrb[0].mxu0
      %558 = vdwg.mxu0
      %v559 = vadd.f32 %v313, %v513
      %v560 = vadd.f32 %v314, %v515
      %v561 = vadd.f32 %v315, %v554
      %562 = vst [vmem:[#allocation2] sm:$0xff] %v559
      %563 = vst [vmem:[#allocation2 + $0x8] sm:$0xff] %v560
      %564 = vst [vmem:[#allocation2 + $0x10] sm:$0xff] %v561
      // Predicated region
      $region41: #{causal_self_attention_forward.3} parent=35 // pred_check
        %p565 = pneg %p306
      $region42: #{causal_self_attention_forward.3} parent=35 // pred_check_branch
        %567 = sbr.rel (%p565) target = $region44
      $region43: #{causal_self_attention_forward.3} parent=35 // pred_region
        %v568 = vld [vmem:[#allocation2] sm:$0xff]
        %v569 = vld [vmem:[#allocation2 + $0x8] sm:$0xff]
        %v570 = vld [vmem:[#allocation2 + $0x10] sm:$0xff]
        %v571 = vld [vmem:[%s291] sm:$0xff]
        %v572 = vld [vmem:[%s295] sm:$0xff]
        %573 = vrot.lane.b32.xlu0 %v568, 112
        %v574 = vpop.permute.xlu0 %573
        %575 = vrot.lane.b32.xlu0 %v569, 112
        %v576 = vpop.permute.xlu0 %575
        %v577 = vlaneseq
        %v578 = vand.u32 %v577, 127
        %vm579 = vcmp.lt.s32.totalorder %v578, 112
        %v580 = vsel %vm579, %v574, %v576
        %v581 = vsel %vm579, %v576, %v574
        %582 = vrot.lane.b32.xlu0 %v568, 16
        %v583 = vpop.permute.xlu0 %582
        %584 = vrot.lane.b32.xlu0 %v569, 16
        %v585 = vpop.permute.xlu0 %584
        %vm586 = vcmp.lt.s32.totalorder %v578, 16
        %v587 = vsel %vm586, %v583, %v585
        %v588 = vsel %vm586, %v585, %v583
        %v589 = vadd.s32 %v578, 128
        %vm590 = vcmp.lt.s32.totalorder %v578, 0
        %v591 = vsub.s32 0, %v578
        %v592 = vsel %vm590, %v591, %v578
        %v593 = vshrl.u32 %v592, 5
        %v594 = vand.u32 %v592, 31
        %v595 = vsub.s32 0, %v594
        %v596 = vsel %vm590, %v595, %v594
        %vm597 = vcmp.lt.s32.totalorder %v589, 0
        %v598 = vsub.s32 0, %v589
        %v599 = vsel %vm597, %v598, %v589
        %v600 = vshrl.u32 %v599, 5
        %v601 = vand.u32 %v599, 31
        %v602 = vsub.s32 0, %v601
        %v603 = vsel %vm597, %v602, %v601
        %vm604 = vcmp.ne.s32.totalorder %v596, 0
        %vm605 = vcmp.ne.s32.totalorder %v603, 0
        %vm606 = vcmp.lt.s32.totalorder %v596, 0
        %vm607 = vcmp.lt.s32.totalorder %v603, 0
        %vm608 = vmand %vm606, %vm604
        %vm609 = vmand %vm607, %vm605
        %v610 = vadd.s32 %v596, 32
        %v611 = vadd.s32 %v603, 32
        %v612 = vsel %vm608, %v610, %v596
        %v613 = vsel %vm609, %v611, %v603
        %vm614 = vcmp.lt.s32.totalorder %v612, 16
        %vm615 = vcmp.lt.s32.totalorder %v613, 16
        %v616 = vsub.f32 0.0, %v580
        %v617 = vsub.f32 0.0, %v581
        %v618 = vsel %vm614, %v616, %v588
        %v619 = vsel %vm615, %v617, %v587
        %v620 = vmul.f32 %v571, %v568
        %v621 = vmul.f32 %v571, %v569
        %v622 = vmul.f32 %v572, %v618
        %v623 = vmul.f32 %v572, %v619
        %v624 = vadd.f32 %v620, %v622
        %v625 = vadd.f32 %v621, %v623
        %v626 = vpack.c.bf16 %v624, %v624
        %v627 = vpack.c.bf16 %v625, %v625
        %v628 = vpack.c.bf16 %v570, %v570
        %v632 = vunpack.c.l.b16 %v626
        %v633 = vunpack.c.l.b16 %v627
        %v634 = vunpack.c.l.b16 %v628
        %v635 = vpack.c.b16 %v633, %v632
        %v636 = vpack.c.b16 %v634, %v634
        %639 = vst [vmem:[%s304] sm:$0xff] %v635
        %640 = vst [vmem:[%s304 + $0x8] sm:$0xf] %v636
      $region44: #{causal_self_attention_forward.3} parent=35 // pred_fallthru
        _
      %p641 = scmp.lt.s32.totalorder %s20, 1
      %s642 = scalar_select %p641, %s20, 1
      %p643 = scmp.lt.s32.totalorder %s21, 0
      %s644 = scalar_select %p643, %s21, 0
      %s645 = smul.addr %s644, 3
      %s646 = smul.addr %s642, 3
      %s647 = sadd.s32 %s645, %s646
      %s648 = smul.addr %s647, 4
      %s649 = scalar_lea.vmem %s4, %s648
      // Predicated region
      $region45: #{causal_self_attention_forward.3} parent=35 // pred_check
        %p650 = pneg %p162
      $region46: #{causal_self_attention_forward.3} parent=35 // pred_check_branch
        %652 = sbr.rel (%p650) target = $region48
      $region47: #{causal_self_attention_forward.3} parent=35 // pred_region
        _
      $region48: #{causal_self_attention_forward.3} parent=35 // pred_fallthru
        _
    $region36: #{causal_self_attention_forward.3} parent=5 // pred_fallthru
      _
    %p653 = scmp.le.s32.totalorder 2, %s10
    // Predicated region
    $region49: #{causal_self_attention_forward.3} parent=5 // pred_check
      %p654 = pneg %p653
    $region50: #{causal_self_attention_forward.3} parent=5 // pred_check_branch
      %656 = sbr.rel (%p654) target = $region52
    $region51: #{causal_self_attention_forward.3} parent=5 // pred_region
      %s657 = ssub.s32 %s10, 2
      // Predicated region
      $region53: #{causal_self_attention_forward.3} parent=51 // pred_check
        %p658 = pneg %p168
      $region54: #{causal_self_attention_forward.3} parent=51 // pred_check_branch
        %660 = sbr.rel (%p658) target = $region56
      $region55: #{causal_self_attention_forward.3} parent=51 // pred_region
        %p661 = scmp.lt.s32.totalorder %s23, 1
        %s662 = scalar_select %p661, %s23, 1
        %p663 = scmp.lt.s32.totalorder %s24, 0
        %s664 = scalar_select %p663, %s24, 0
        %s665 = smul.addr %s664, 3
        %s666 = smul.addr %s662, 3
        %s667 = sadd.s32 %s665, %s666
        %s668 = smul.addr %s667, 4
        %s669 = scalar_lea.vmem %s4, %s668
      $region56: #{causal_self_attention_forward.3} parent=51 // pred_fallthru
        _
    $region52: #{causal_self_attention_forward.3} parent=5 // pred_fallthru
      _
  $region6: #{causal_self_attention_forward.3} parent=0 // loop_footer
    %s14 = sadd.s32 1, %s10
  $region7: #{causal_self_attention_forward.3} parent=0 // loop_footer_branch
    %9 = sbr.rel target = $region3
  $region8: #{causal_self_attention_forward.3} parent=0 // loop_exit
    _

// kernel: causal_self_attention_forward.4
$region0: #{causal_self_attention_forward.4}
  #allocation0 [shape = 'u32[]', space=smem, size = 0x4, offset = 0x4, fixed_abs, tag = 'smem constant byte address 0x4 - core index']
  #allocation1 [shape = 'u32[144,128]{1,0:T(1,128)}', space=vmem, size = 0x12000, scoped, tag = 'internal scratch']
  #allocation2 [shape = 'f32[4,8]{1,0:T(4,128)}', space=vmem, size = 0x800, scoped, tag = 'scratch operand']
  #allocation3 [shape = 'f32[4,8]{1,0:T(4,128)}', space=vmem, size = 0x800, scoped, tag = 'scratch operand']
  #allocation4 [shape = 'f32[4,8,32]{2,1,0:T(8,128)}', space=vmem, size = 0x4000, scoped, tag = 'scratch operand']
  %s0 = inlined_call_operand.vmem [shape: bf16[2,8,384], index: 0, kind: input, shape index: {}, may-alias: {0,1,2}]
  %s1 = inlined_call_operand.vmem [shape: bf16[2,8,384], index: 1, kind: input, shape index: {}, may-alias: {0,1,2}]
  %s2 = inlined_call_operand.vmem [shape: bf16[2,8,384], index: 2, kind: input, shape index: {}, may-alias: {0,1,2}]
  %s3 = inlined_call_operand.vmem [shape: bf16[2,8,128], index: 3, kind: output, shape index: {}]
  %s4 = sld [smem:[#allocation0]]
  $region53: #{causal_self_attention_forward.4} parent=0
    _
  %s6 = ssub.s32 1, %s4
  %s7 = scalar_select 0, %s6, %s4
  loop: start=0, step=1, limit=4
  $region2: #{causal_self_attention_forward.4} parent=0 // loop_pre_header
    _
  $region3: #{causal_self_attention_forward.4} parent=0 // loop_header
    %s9 = sphi 0, %s13
    %p10 = scmp.ge.s32.totalorder %s9, 4
    %s16 = sphi 0, %s35
    %s17 = sphi 0, %s31
    %s18 = sphi 0, %s27
    %s19 = sphi 0, %s16
    %s20 = sphi 0, %s17
    %s21 = sphi 0, %s18
    %s22 = sphi 0, %s19
    %s23 = sphi 0, %s20
    %s24 = sphi 0, %s21
    %s40 = sphi 0, %s42
    %s43 = sphi 0, %s40
    %s44 = sphi 0, %s43
    %s60 = sphi 0, %s44
    %s68 = sphi 0, %s70
    %s71 = sphi 0, %s68
    %s72 = sphi 0, %s71
    %s88 = sphi 0, %s72
    %s96 = sphi 0, %s98
    %s99 = sphi 0, %s96
    %s100 = sphi 0, %s99
    %s116 = sphi 0, %s100
    %s124 = sphi 0, %s126
    %s127 = sphi 0, %s124
    %s128 = sphi 0, %s127
    %s144 = sphi 0, %s128
  $region4: #{causal_self_attention_forward.4} parent=0 // loop_header_branch
    %12 = sbr.rel (%p10) target = $region8
  $region5: #{causal_self_attention_forward.4} parent=0 // loop_body
    %s14 = ssub.s32 %s9, 1
    %s15 = ssub.s32 %s9, 2
    %s25 = sadd.s32 1, %s18
    %p26 = scmp.ge.s32.totalorder %s25, 1
    %s27 = scalar_select %p26, 0, %s25
    %s28 = sadd.s32 1, %s17
    %s29 = scalar_select %p26, %s28, %s17
    %p30 = scmp.ge.s32.totalorder %s29, 1
    %s31 = scalar_select %p30, 0, %s29
    %s32 = sadd.s32 1, %s16
    %s33 = scalar_select %p30, %s32, %s16
    %p34 = scmp.ge.s32.totalorder %s33, 2
    %s35 = scalar_select %p34, 0, %s33
    %s36 = ssub.s32 %s16, %s35
    %s37 = ssub.s32 %s17, %s31
    %s38 = sor.u32 %s36, %s37
    %p39 = scmp.eq.s32.totalorder %s38, 0
    %s41 = sadd.s32 %s40, 1
    %s42 = scalar_select %p39, %s40, %s41
    %p45 = pneg %p39
    %p46 = scmp.eq.s32.totalorder %s9, 1
    %p47 = por %p45, %p46
    %p48 = scmp.ne.s32.totalorder %s40, %s43
    %p49 = scmp.eq.s32.totalorder %s9, 0
    %p50 = por %p48, %p49
    %p51 = scmp.ne.s32.totalorder %s40, %s43
    %p52 = scmp.eq.s32.totalorder %s14, 1
    %p53 = por %p51, %p52
    %p54 = scmp.ne.s32.totalorder %s43, %s44
    %p55 = scmp.eq.s32.totalorder %s14, 0
    %p56 = por %p54, %p55
    %p57 = scmp.ne.s32.totalorder %s43, %s44
    %p58 = scmp.eq.s32.totalorder %s15, 1
    %p59 = por %p57, %p58
    %p61 = scmp.ne.s32.totalorder %s44, %s60
    %p62 = scmp.eq.s32.totalorder %s15, 0
    %p63 = por %p61, %p62
    %s64 = ssub.s32 %s16, %s35
    %s65 = ssub.s32 %s18, %s27
    %s66 = sor.u32 %s64, %s65
    %p67 = scmp.eq.s32.totalorder %s66, 0
    %s69 = sadd.s32 %s68, 1
    %s70 = scalar_select %p67, %s68, %s69
    %p73 = pneg %p67
    %p74 = scmp.eq.s32.totalorder %s9, 1
    %p75 = por %p73, %p74
    %p76 = scmp.ne.s32.totalorder %s68, %s71
    %p77 = scmp.eq.s32.totalorder %s9, 0
    %p78 = por %p76, %p77
    %p79 = scmp.ne.s32.totalorder %s68, %s71
    %p80 = scmp.eq.s32.totalorder %s14, 1
    %p81 = por %p79, %p80
    %p82 = scmp.ne.s32.totalorder %s71, %s72
    %p83 = scmp.eq.s32.totalorder %s14, 0
    %p84 = por %p82, %p83
    %p85 = scmp.ne.s32.totalorder %s71, %s72
    %p86 = scmp.eq.s32.totalorder %s15, 1
    %p87 = por %p85, %p86
    %p89 = scmp.ne.s32.totalorder %s72, %s88
    %p90 = scmp.eq.s32.totalorder %s15, 0
    %p91 = por %p89, %p90
    %s92 = ssub.s32 %s16, %s35
    %s93 = ssub.s32 %s18, %s27
    %s94 = sor.u32 %s92, %s93
    %p95 = scmp.eq.s32.totalorder %s94, 0
    %s97 = sadd.s32 %s96, 1
    %s98 = scalar_select %p95, %s96, %s97
    %p101 = pneg %p95
    %p102 = scmp.eq.s32.totalorder %s9, 1
    %p103 = por %p101, %p102
    %p104 = scmp.ne.s32.totalorder %s96, %s99
    %p105 = scmp.eq.s32.totalorder %s9, 0
    %p106 = por %p104, %p105
    %p107 = scmp.ne.s32.totalorder %s96, %s99
    %p108 = scmp.eq.s32.totalorder %s14, 1
    %p109 = por %p107, %p108
    %p110 = scmp.ne.s32.totalorder %s99, %s100
    %p111 = scmp.eq.s32.totalorder %s14, 0
    %p112 = por %p110, %p111
    %p113 = scmp.ne.s32.totalorder %s99, %s100
    %p114 = scmp.eq.s32.totalorder %s15, 1
    %p115 = por %p113, %p114
    %p117 = scmp.ne.s32.totalorder %s100, %s116
    %p118 = scmp.eq.s32.totalorder %s15, 0
    %p119 = por %p117, %p118
    %s120 = ssub.s32 %s16, %s35
    %s121 = ssub.s32 %s17, %s31
    %s122 = sor.u32 %s120, %s121
    %p123 = scmp.eq.s32.totalorder %s122, 0
    %s125 = sadd.s32 %s124, 1
    %s126 = scalar_select %p123, %s124, %s125
    %p129 = pneg %p123
    %p130 = scmp.eq.s32.totalorder %s9, 1
    %p131 = por %p129, %p130
    %p132 = scmp.ne.s32.totalorder %s124, %s127
    %p133 = scmp.eq.s32.totalorder %s9, 0
    %p134 = por %p132, %p133
    %p135 = scmp.ne.s32.totalorder %s124, %s127
    %p136 = scmp.eq.s32.totalorder %s14, 1
    %p137 = por %p135, %p136
    %p138 = scmp.ne.s32.totalorder %s127, %s128
    %p139 = scmp.eq.s32.totalorder %s14, 0
    %p140 = por %p138, %p139
    %p141 = scmp.ne.s32.totalorder %s127, %s128
    %p142 = scmp.eq.s32.totalorder %s15, 1
    %p143 = por %p141, %p142
    %p145 = scmp.ne.s32.totalorder %s128, %s144
    %p146 = scmp.eq.s32.totalorder %s15, 0
    %p147 = por %p145, %p146
    %p148 = scmp.le.s32.totalorder 1, %s9
    %p149 = scmp.lt.s32.totalorder %s9, 3
    %p150 = pnand %p148, %p149
    %p151 = pneg %p150
    // Predicated region
    $region9: #{causal_self_attention_forward.4} parent=5 // pred_check
      _
    $region10: #{causal_self_attention_forward.4} parent=5 // pred_check_branch
      %153 = sbr.rel (%p150) target = $region12
    $region11: #{causal_self_attention_forward.4} parent=5 // pred_region
      %s154 = ssub.s32 %s9, 1
    $region12: #{causal_self_attention_forward.4} parent=5 // pred_fallthru
      _
    %p155 = scmp.lt.s32.totalorder %s9, 2
    // Predicated region
    $region13: #{causal_self_attention_forward.4} parent=5 // pred_check
      %p156 = pneg %p155
    $region14: #{causal_self_attention_forward.4} parent=5 // pred_check_branch
      %158 = sbr.rel (%p156) target = $region16
    $region15: #{causal_self_attention_forward.4} parent=5 // pred_region
      // Predicated region
      $region17: #{causal_self_attention_forward.4} parent=15 // pred_check
        %p159 = pneg %p50
      $region18: #{causal_self_attention_forward.4} parent=15 // pred_check_branch
        %161 = sbr.rel (%p159) target = $region20
      $region19: #{causal_self_attention_forward.4} parent=15 // pred_region
        %p162 = scmp.lt.s32.totalorder %s16, 1
        %s163 = scalar_select %p162, %s16, 1
        %p164 = scmp.lt.s32.totalorder %s17, 0
        %s165 = scalar_select %p164, %s17, 0
        %s166 = smul.addr %s165, 3
        %s167 = smul.addr %s163, 3
        %s168 = sadd.s32 %s166, %s167
        %s169 = smul.addr %s168, 4
        %s170 = scalar_lea.vmem %s0, %s169
      $region20: #{causal_self_attention_forward.4} parent=15 // pred_fallthru
        _
      // Predicated region
      $region21: #{causal_self_attention_forward.4} parent=15 // pred_check
        %p171 = pneg %p78
      $region22: #{causal_self_attention_forward.4} parent=15 // pred_check_branch
        %173 = sbr.rel (%p171) target = $region24
      $region23: #{causal_self_attention_forward.4} parent=15 // pred_region
        %p174 = scmp.lt.s32.totalorder %s16, 1
        %s175 = scalar_select %p174, %s16, 1
        %p176 = scmp.lt.s32.totalorder %s18, 0
        %s177 = scalar_select %p176, %s18, 0
        %s178 = smul.addr %s177, 3
        %s179 = sadd.s32 1, %s178
        %s180 = smul.addr %s175, 3
        %s181 = sadd.s32 %s179, %s180
        %s182 = smul.addr %s181, 4
        %s183 = scalar_lea.vmem %s1, %s182
      $region24: #{causal_self_attention_forward.4} parent=15 // pred_fallthru
        _
      // Predicated region
      $region25: #{causal_self_attention_forward.4} parent=15 // pred_check
        %p184 = pneg %p106
      $region26: #{causal_self_attention_forward.4} parent=15 // pred_check_branch
        %186 = sbr.rel (%p184) target = $region28
      $region27: #{causal_self_attention_forward.4} parent=15 // pred_region
        %p187 = scmp.lt.s32.totalorder %s16, 1
        %s188 = scalar_select %p187, %s16, 1
        %p189 = scmp.lt.s32.totalorder %s18, 0
        %s190 = scalar_select %p189, %s18, 0
        %s191 = smul.addr %s190, 3
        %s192 = sadd.s32 2, %s191
        %s193 = smul.addr %s188, 3
        %s194 = sadd.s32 %s192, %s193
        %s195 = smul.addr %s194, 4
        %s196 = scalar_lea.vmem %s2, %s195
      $region28: #{causal_self_attention_forward.4} parent=15 // pred_fallthru
        _
    $region16: #{causal_self_attention_forward.4} parent=5 // pred_fallthru
      _
    %p197 = scmp.le.s32.totalorder 1, %s9
    %p198 = scmp.lt.s32.totalorder %s9, 3
    %p199 = pnand %p197, %p198
    %p200 = pneg %p199
    // Predicated region
    $region29: #{causal_self_attention_forward.4} parent=5 // pred_check
      _
    $region30: #{causal_self_attention_forward.4} parent=5 // pred_check_branch
      %202 = sbr.rel (%p199) target = $region32
    $region31: #{causal_self_attention_forward.4} parent=5 // pred_region
      %s203 = ssub.s32 %s9, 1
      %p204 = scmp.lt.s32.totalorder %s19, 1
      %s205 = scalar_select %p204, %s19, 1
      %p206 = scmp.lt.s32.totalorder %s20, 0
      %s207 = scalar_select %p206, %s20, 0
      %s208 = smul.addr %s207, 3
      %s209 = smul.addr %s205, 3
      %s210 = sadd.s32 %s208, %s209
      %s211 = smul.addr %s210, 4
      %s212 = scalar_lea.vmem %s0, %s211
      %p213 = pneg %p56
      %p214 = pneg %p53
      %p215 = scmp.lt.s32.totalorder %s19, 1
      %s216 = scalar_select %p215, %s19, 1
      %p217 = scmp.lt.s32.totalorder %s21, 0
      %s218 = scalar_select %p217, %s21, 0
      %s219 = smul.addr %s218, 3
      %s220 = sadd.s32 1, %s219
      %s221 = smul.addr %s216, 3
      %s222 = sadd.s32 %s220, %s221
      %s223 = smul.addr %s222, 4
      %s224 = scalar_lea.vmem %s1, %s223
      %p225 = pneg %p84
      %p226 = pneg %p81
      %p227 = scmp.lt.s32.totalorder %s19, 1
      %s228 = scalar_select %p227, %s19, 1
      %p229 = scmp.lt.s32.totalorder %s21, 0
      %s230 = scalar_select %p229, %s21, 0
      %s231 = smul.addr %s230, 3
      %s232 = sadd.s32 2, %s231
      %s233 = smul.addr %s228, 3
      %s234 = sadd.s32 %s232, %s233
      %s235 = smul.addr %s234, 4
      %s236 = scalar_lea.vmem %s2, %s235
      %p237 = pneg %p112
      %p238 = pneg %p109
      %p239 = pneg %p140
      %p240 = pneg %p137
      %p241 = scmp.lt.s32.totalorder %s19, 1
      %s242 = scalar_select %p241, %s19, 1
      %p243 = scmp.lt.s32.totalorder %s20, 0
      %s244 = scalar_select %p243, %s20, 0
      %s245 = sadd.s32 %s244, %s242
      %s246 = smul.addr %s245, 4
      %s247 = scalar_lea.vmem %s3, %s246
      %p248 = scmp.lt.s32.totalorder %s19, 1
      %s249 = scalar_select %p248, %s19, 1
      %p250 = scmp.lt.s32.totalorder %s20, 0
      %s251 = scalar_select %p250, %s20, 0
      %s252 = smul.addr %s251, 3
      %s253 = smul.addr %s249, 3
      %s254 = sadd.s32 %s252, %s253
      %s255 = smul.addr %s254, 4
      %s256 = scalar_lea.vmem %s0, %s255
      %p257 = scmp.lt.s32.totalorder %s19, 1
      %s258 = scalar_select %p257, %s19, 1
      %p259 = scmp.lt.s32.totalorder %s21, 0
      %s260 = scalar_select %p259, %s21, 0
      %s261 = smul.addr %s260, 3
      %s262 = sadd.s32 1, %s261
      %s263 = smul.addr %s258, 3
      %s264 = sadd.s32 %s262, %s263
      %s265 = smul.addr %s264, 4
      %s266 = scalar_lea.vmem %s1, %s265
      %p267 = scmp.lt.s32.totalorder %s19, 1
      %s268 = scalar_select %p267, %s19, 1
      %p269 = scmp.lt.s32.totalorder %s21, 0
      %s270 = scalar_select %p269, %s21, 0
      %s271 = smul.addr %s270, 3
      %s272 = sadd.s32 2, %s271
      %s273 = smul.addr %s268, 3
      %s274 = sadd.s32 %s272, %s273
      %s275 = smul.addr %s274, 4
      %s276 = scalar_lea.vmem %s2, %s275
      %p277 = scmp.lt.s32.totalorder %s19, 1
      %s278 = scalar_select %p277, %s19, 1
      %p279 = scmp.lt.s32.totalorder %s20, 0
      %s280 = scalar_select %p279, %s20, 0
      %s281 = sadd.s32 %s280, %s278
      %s282 = smul.addr %s281, 4
      %s283 = scalar_lea.vmem %s3, %s282
      %p285 = scmp.eq.s32.totalorder %s21, 0
      // Predicated region
      $region33: #{causal_self_attention_forward.4} parent=31 // pred_check
        %p286 = pneg %p285
      $region34: #{causal_self_attention_forward.4} parent=31 // pred_check_branch
        %288 = sbr.rel (%p286) target = $region36
      $region35: #{causal_self_attention_forward.4} parent=31 // pred_region
        %vm289 = vcmask 60416
        %290 = vst.msk [vmem:[#allocation2] sm:$0xf] %vm289, -inf
        %291 = vst.msk [vmem:[#allocation3] sm:$0xf] %vm289, 0.0
        %vm292 = vcmask 261120
        %293 = vst.msk [vmem:[#allocation4] sm:$0xff] %vm292, 0.0
        %294 = vst.msk [vmem:[#allocation4 + $0x8] sm:$0xff] %vm292, 0.0
        %295 = vst.msk [vmem:[#allocation4 + $0x10] sm:$0xff] %vm292, 0.0
        %296 = vst.msk [vmem:[#allocation4 + $0x18] sm:$0xff] %vm292, 0.0
      $region36: #{causal_self_attention_forward.4} parent=31 // pred_fallthru
        _
      %v297 = vld [vmem:[%s256] sm:$0xf]
      %v298 = vld [vmem:[%s266] sm:$0xf]
      %v299 = vld [vmem:[%s276] sm:$0xf]
      %vm300 = vcmask 261120
      %v302 = vsel %vm300, %v297, 0
      %v305 = vsel %vm300, %v298, 0
      %307 = vmatprep.subr.bf16.mxu0 0
      %308 = vmatpush1.bf16.xpose.msra.mxu0 %v305
      %309 = vmatprep.subr.bf16.mxu0 0
      %310 = vmatpush1.bf16.xpose.msra.mxu0 0
      %311 = vmatprep.subr.bf16.mxu0 0
      %312 = vmatpush1.bf16.xpose.msra.mxu0 0
      %313 = vmatprep.subr.bf16.mxu0 0
      %314 = vmatpush1.bf16.xpose.msra.mxu0 0
      %315 = vmatprep.subr.bf16.mxu0 0
      %316 = vmatpush1.bf16.xpose.msra.mxu0 0
      %317 = vmatprep.subr.bf16.mxu0 0
      %318 = vmatpush1.bf16.xpose.msra.mxu0 0
      %319 = vmatprep.subr.bf16.mxu0 0
      %320 = vmatpush1.bf16.xpose.msra.mxu0 0
      %321 = vmatprep.subr.bf16.mxu0 0
      %322 = vmatpush1.bf16.xpose.msra.mxu0 0
      %323 = vmatprep.subr.bf16.mxu0 0
      %324 = vmatpush1.bf16.xpose.msra.mxu0 0
      %325 = vmatprep.subr.bf16.mxu0 0
      %326 = vmatpush1.bf16.xpose.msra.mxu0 0
      %327 = vmatprep.subr.bf16.mxu0 0
      %328 = vmatpush1.bf16.xpose.msra.mxu0 0
      %329 = vmatprep.subr.bf16.mxu0 0
      %330 = vmatpush1.bf16.xpose.msra.mxu0 0
      %331 = vmatprep.subr.bf16.mxu0 0
      %332 = vmatpush1.bf16.xpose.msra.mxu0 0
      %333 = vmatprep.subr.bf16.mxu0 0
      %334 = vmatpush1.bf16.xpose.msra.mxu0 0
      %335 = vmatprep.subr.bf16.mxu0 0
      %336 = vmatpush1.bf16.xpose.msra.mxu0 0
      %337 = vmatprep.subr.bf16.mxu0 0
      %338 = vmatpush1.bf16.xpose.msra.mxu0 0
      %339 = vmatprep.mubr.bf16.mxu0 0
      %340 = vmatmul.mubr.bf16.gmra.mrb[0].mxu0 %v302
      %v341 = vpop.f32.mrb[0].mxu0
      %v342 = vadd.f32 0.0, %v341
      %v343 = vpop.f32.mrb[0].mxu0
      %v344 = vpop.f32.mrb[0].mxu0
      %v345 = vpop.f32.mrb[0].mxu0
      %346 = vdwg.mxu0
      %v348 = vunpack.c.l.b16 %v297
      %v349 = vpack.c.b16 %v348, %v348
      %350 = vrot.lane.b32.xlu0 %v349, 96
      %v351 = vpop.permute.xlu0 %350
      %v353 = vunpack.c.l.b16 %v298
      %v354 = vpack.c.b16 %v353, %v353
      %355 = vrot.lane.b32.xlu0 %v354, 96
      %v356 = vpop.permute.xlu0 %355
      %v358 = vsel %vm300, %v351, 0
      %v361 = vsel %vm300, %v356, 0
      %363 = vmatprep.subr.bf16.mxu0 0
      %364 = vmatpush1.bf16.xpose.msra.mxu0 %v361
      %365 = vmatprep.subr.bf16.mxu0 0
      %366 = vmatpush1.bf16.xpose.msra.mxu0 0
      %367 = vmatprep.subr.bf16.mxu0 0
      %368 = vmatpush1.bf16.xpose.msra.mxu0 0
      %369 = vmatprep.subr.bf16.mxu0 0
      %370 = vmatpush1.bf16.xpose.msra.mxu0 0
      %371 = vmatprep.subr.bf16.mxu0 0
      %372 = vmatpush1.bf16.xpose.msra.mxu0 0
      %373 = vmatprep.subr.bf16.mxu0 0
      %374 = vmatpush1.bf16.xpose.msra.mxu0 0
      %375 = vmatprep.subr.bf16.mxu0 0
      %376 = vmatpush1.bf16.xpose.msra.mxu0 0
      %377 = vmatprep.subr.bf16.mxu0 0
      %378 = vmatpush1.bf16.xpose.msra.mxu0 0
      %379 = vmatprep.subr.bf16.mxu0 0
      %380 = vmatpush1.bf16.xpose.msra.mxu0 0
      %381 = vmatprep.subr.bf16.mxu0 0
      %382 = vmatpush1.bf16.xpose.msra.mxu0 0
      %383 = vmatprep.subr.bf16.mxu0 0
      %384 = vmatpush1.bf16.xpose.msra.mxu0 0
      %385 = vmatprep.subr.bf16.mxu0 0
      %386 = vmatpush1.bf16.xpose.msra.mxu0 0
      %387 = vmatprep.subr.bf16.mxu0 0
      %388 = vmatpush1.bf16.xpose.msra.mxu0 0
      %389 = vmatprep.subr.bf16.mxu0 0
      %390 = vmatpush1.bf16.xpose.msra.mxu0 0
      %391 = vmatprep.subr.bf16.mxu0 0
      %392 = vmatpush1.bf16.xpose.msra.mxu0 0
      %393 = vmatprep.subr.bf16.mxu0 0
      %394 = vmatpush1.bf16.xpose.msra.mxu0 0
      %395 = vmatprep.mubr.bf16.mxu0 0
      %396 = vmatmul.mubr.bf16.gmra.mrb[0].mxu0 %v358
      %v397 = vpop.f32.mrb[0].mxu0
      %v398 = vadd.f32 0.0, %v397
      %v399 = vpop.f32.mrb[0].mxu0
      %v400 = vpop.f32.mrb[0].mxu0
      %v401 = vpop.f32.mrb[0].mxu0
      %402 = vdwg.mxu0
      %403 = vrot.lane.b32.xlu0 %v349, 64
      %v404 = vpop.permute.xlu0 %403
      %405 = vrot.lane.b32.xlu0 %v354, 64
      %v406 = vpop.permute.xlu0 %405
      %v408 = vsel %vm300, %v404, 0
      %v411 = vsel %vm300, %v406, 0
      %413 = vmatprep.subr.bf16.mxu0 0
      %414 = vmatpush1.bf16.xpose.msra.mxu0 %v411
      %415 = vmatprep.subr.bf16.mxu0 0
      %416 = vmatpush1.bf16.xpose.msra.mxu0 0
      %417 = vmatprep.subr.bf16.mxu0 0
      %418 = vmatpush1.bf16.xpose.msra.mxu0 0
      %419 = vmatprep.subr.bf16.mxu0 0
      %420 = vmatpush1.bf16.xpose.msra.mxu0 0
      %421 = vmatprep.subr.bf16.mxu0 0
      %422 = vmatpush1.bf16.xpose.msra.mxu0 0
      %423 = vmatprep.subr.bf16.mxu0 0
      %424 = vmatpush1.bf16.xpose.msra.mxu0 0
      %425 = vmatprep.subr.bf16.mxu0 0
      %426 = vmatpush1.bf16.xpose.msra.mxu0 0
      %427 = vmatprep.subr.bf16.mxu0 0
      %428 = vmatpush1.bf16.xpose.msra.mxu0 0
      %429 = vmatprep.subr.bf16.mxu0 0
      %430 = vmatpush1.bf16.xpose.msra.mxu0 0
      %431 = vmatprep.subr.bf16.mxu0 0
      %432 = vmatpush1.bf16.xpose.msra.mxu0 0
      %433 = vmatprep.subr.bf16.mxu0 0
      %434 = vmatpush1.bf16.xpose.msra.mxu0 0
      %435 = vmatprep.subr.bf16.mxu0 0
      %436 = vmatpush1.bf16.xpose.msra.mxu0 0
      %437 = vmatprep.subr.bf16.mxu0 0
      %438 = vmatpush1.bf16.xpose.msra.mxu0 0
      %439 = vmatprep.subr.bf16.mxu0 0
      %440 = vmatpush1.bf16.xpose.msra.mxu0 0
      %441 = vmatprep.subr.bf16.mxu0 0
      %442 = vmatpush1.bf16.xpose.msra.mxu0 0
      %443 = vmatprep.subr.bf16.mxu0 0
      %444 = vmatpush1.bf16.xpose.msra.mxu0 0
      %445 = vmatprep.mubr.bf16.mxu0 0
      %446 = vmatmul.mubr.bf16.gmra.mrb[0].mxu0 %v408
      %v447 = vpop.f32.mrb[0].mxu0
      %v448 = vadd.f32 0.0, %v447
      %v449 = vpop.f32.mrb[0].mxu0
      %v450 = vpop.f32.mrb[0].mxu0
      %v451 = vpop.f32.mrb[0].mxu0
      %452 = vdwg.mxu0
      %453 = vrot.lane.b32.xlu0 %v349, 32
      %v454 = vpop.permute.xlu0 %453
      %455 = vrot.lane.b32.xlu0 %v354, 32
      %v456 = vpop.permute.xlu0 %455
      %v458 = vsel %vm300, %v454, 0
      %v461 = vsel %vm300, %v456, 0
      %463 = vmatprep.subr.bf16.mxu0 0
      %464 = vmatpush1.bf16.xpose.msra.mxu0 %v461
      %465 = vmatprep.subr.bf16.mxu0 0
      %466 = vmatpush1.bf16.xpose.msra.mxu0 0
      %467 = vmatprep.subr.bf16.mxu0 0
      %468 = vmatpush1.bf16.xpose.msra.mxu0 0
      %469 = vmatprep.subr.bf16.mxu0 0
      %470 = vmatpush1.bf16.xpose.msra.mxu0 0
      %471 = vmatprep.subr.bf16.mxu0 0
      %472 = vmatpush1.bf16.xpose.msra.mxu0 0
      %473 = vmatprep.subr.bf16.mxu0 0
      %474 = vmatpush1.bf16.xpose.msra.mxu0 0
      %475 = vmatprep.subr.bf16.mxu0 0
      %476 = vmatpush1.bf16.xpose.msra.mxu0 0
      %477 = vmatprep.subr.bf16.mxu0 0
      %478 = vmatpush1.bf16.xpose.msra.mxu0 0
      %479 = vmatprep.subr.bf16.mxu0 0
      %480 = vmatpush1.bf16.xpose.msra.mxu0 0
      %481 = vmatprep.subr.bf16.mxu0 0
      %482 = vmatpush1.bf16.xpose.msra.mxu0 0
      %483 = vmatprep.subr.bf16.mxu0 0
      %484 = vmatpush1.bf16.xpose.msra.mxu0 0
      %485 = vmatprep.subr.bf16.mxu0 0
      %486 = vmatpush1.bf16.xpose.msra.mxu0 0
      %487 = vmatprep.subr.bf16.mxu0 0
      %488 = vmatpush1.bf16.xpose.msra.mxu0 0
      %489 = vmatprep.subr.bf16.mxu0 0
      %490 = vmatpush1.bf16.xpose.msra.mxu0 0
      %491 = vmatprep.subr.bf16.mxu0 0
      %492 = vmatpush1.bf16.xpose.msra.mxu0 0
      %493 = vmatprep.subr.bf16.mxu0 0
      %494 = vmatpush1.bf16.xpose.msra.mxu0 0
      %495 = vmatprep.mubr.bf16.mxu0 0
      %496 = vmatmul.mubr.bf16.gmra.mrb[0].mxu0 %v458
      %v497 = vpop.f32.mrb[0].mxu0
      %v498 = vadd.f32 0.0, %v497
      %v499 = vpop.f32.mrb[0].mxu0
      %v500 = vpop.f32.mrb[0].mxu0
      %v501 = vpop.f32.mrb[0].mxu0
      %502 = vdwg.mxu0
      %v503 = vld [vmem:[#allocation2] sm:$0xf]
      %vm504 = vcmask 64512
      %v505 = vsel %vm504, %v342, -inf
      %506 = vmax.xlane.f32.xlu0 %v505
      %v507 = vpop.xlane.xlu0 %506
      %v508 = vsel %vm504, %v398, -inf
      %509 = vmax.xlane.f32.xlu0 %v508
      %v510 = vpop.xlane.xlu0 %509
      %v511 = vsel %vm504, %v448, -inf
      %512 = vmax.xlane.f32.xlu0 %v511
      %v513 = vpop.xlane.xlu0 %512
      %v514 = vsel %vm504, %v498, -inf
      %515 = vmax.xlane.f32.xlu0 %v514
      %v516 = vpop.xlane.xlu0 %515
      %v521 = vlaneseq
      %v522 = vand.u32 %v521, 127
      %v523 = vlaneseq
      %v524 = vshrl.u32 %v523, 7
      %v525 = vsub.s32 %v522, %v524
      %v526 = vrot.slane %v507, %v525
      %v527 = vlaneseq
      %v528 = vshrl.u32 %v527, 7
      %v529 = vsub.s32 %v522, %v528
      %v530 = vrot.slane %v510, %v529
      %v531 = vlaneseq
      %v532 = vshrl.u32 %v531, 7
      %v533 = vsub.s32 %v522, %v532
      %v534 = vrot.slane %v513, %v533
      %v535 = vlaneseq
      %v536 = vshrl.u32 %v535, 7
      %v537 = vsub.s32 %v522, %v536
      %v538 = vrot.slane %v516, %v537
      %vm539 = vcmask 1041409
      %v540 = vsel %vm539, %v530, %v526
      %vm541 = vcmask 1042434
      %v542 = vsel %vm541, %v534, %v540
      %vm543 = vcmask 1043459
      %v544 = vsel %vm543, %v538, %v542
      %v546 = vmax.f32 %v503, %v544
      %v547 = vsub.f32 %v503, %v546
      %v548 = vmul.f32 %v547, 1.442695
      %v549 = vpow.pop %v548
      %v550 = vlaneseq
      %v551 = vshrl.u32 %v550, 7
      %v552 = vsub.s32 0, %v551
      %v553 = vrot.slane %v546, %v552
      %555 = vbcast.lane.b32.xlu0 %v553, 256
      %v556 = vpop.permute.xlu0 %555
      %v557 = vlaneseq
      %v558 = vshrl.u32 %v557, 7
      %v559 = vsub.s32 1, %v558
      %v560 = vrot.slane %v546, %v559
      %562 = vbcast.lane.b32.xlu0 %v560, 256
      %v563 = vpop.permute.xlu0 %562
      %v564 = vlaneseq
      %v565 = vshrl.u32 %v564, 7
      %v566 = vsub.s32 2, %v565
      %v567 = vrot.slane %v546, %v566
      %569 = vbcast.lane.b32.xlu0 %v567, 256
      %v570 = vpop.permute.xlu0 %569
      %v571 = vlaneseq
      %v572 = vshrl.u32 %v571, 7
      %v573 = vsub.s32 3, %v572
      %v574 = vrot.slane %v546, %v573
      %576 = vbcast.lane.b32.xlu0 %v574, 256
      %v577 = vpop.permute.xlu0 %576
      %v578 = vsub.f32 %v342, %v556
      %v579 = vsub.f32 %v398, %v563
      %v580 = vsub.f32 %v448, %v570
      %v581 = vsub.f32 %v498, %v577
      %v582 = vmul.f32 %v578, 1.442695
      %v583 = vpow.pop %v582
      %v584 = vmul.f32 %v579, 1.442695
      %v585 = vpow.pop %v584
      %v586 = vmul.f32 %v580, 1.442695
      %v587 = vpow.pop %v586
      %v588 = vmul.f32 %v581, 1.442695
      %v589 = vpow.pop %v588
      %v590 = vld [vmem:[#allocation3] sm:$0xf]
      %v591 = vmul.f32 %v549, %v590
      %v592 = vsel %vm504, %v583, 0.0
      %593 = vadd.xlane.f32.xlu0 %v592
      %v594 = vpop.xlane.xlu0 %593
      %v595 = vsel %vm504, %v585, 0.0
      %596 = vadd.xlane.f32.xlu0 %v595
      %v597 = vpop.xlane.xlu0 %596
      %v598 = vsel %vm504, %v587, 0.0
      %599 = vadd.xlane.f32.xlu0 %v598
      %v600 = vpop.xlane.xlu0 %599
      %v601 = vsel %vm504, %v589, 0.0
      %602 = vadd.xlane.f32.xlu0 %v601
      %v603 = vpop.xlane.xlu0 %602
      %v608 = vlaneseq
      %v609 = vshrl.u32 %v608, 7
      %v610 = vsub.s32 %v522, %v609
      %v611 = vrot.slane %v594, %v610
      %v612 = vlaneseq
      %v613 = vshrl.u32 %v612, 7
      %v614 = vsub.s32 %v522, %v613
      %v615 = vrot.slane %v597, %v614
      %v616 = vlaneseq
      %v617 = vshrl.u32 %v616, 7
      %v618 = vsub.s32 %v522, %v617
      %v619 = vrot.slane %v600, %v618
      %v620 = vlaneseq
      %v621 = vshrl.u32 %v620, 7
      %v622 = vsub.s32 %v522, %v621
      %v623 = vrot.slane %v603, %v622
      %v624 = vsel %vm539, %v615, %v611
      %v625 = vsel %vm541, %v619, %v624
      %v626 = vsel %vm543, %v623, %v625
      %v628 = vadd.f32 %v591, %v626
      %vm629 = vcmask 60416
      %630 = vst.msk [vmem:[#allocation3] sm:$0xf] %vm629, %v628
      %631 = vst.msk [vmem:[#allocation2] sm:$0xf] %vm629, %v546
      %v632 = vpack.c.bf16 %v583, %v583
      %v634 = vsel %vm504, %v632, 0
      %vm636 = vcmask 1043456
      %v638 = vsel %vm636, %v299, 0
      %640 = vmatprep.subr.bf16.mxu0 0
      %641 = vmatpush1.bf16.msra.mxu0 %v638
      %642 = vmatprep.subr.bf16.mxu0 0
      %643 = vmatpush1.bf16.msra.mxu0 0
      %644 = vmatprep.subr.bf16.mxu0 0
      %645 = vmatpush1.bf16.msra.mxu0 0
      %646 = vmatprep.subr.bf16.mxu0 0
      %647 = vmatpush1.bf16.msra.mxu0 0
      %648 = vmatprep.subr.bf16.mxu0 0
      %649 = vmatpush1.bf16.msra.mxu0 0
      %650 = vmatprep.subr.bf16.mxu0 0
      %651 = vmatpush1.bf16.msra.mxu0 0
      %652 = vmatprep.subr.bf16.mxu0 0
      %653 = vmatpush1.bf16.msra.mxu0 0
      %654 = vmatprep.subr.bf16.mxu0 0
      %655 = vmatpush1.bf16.msra.mxu0 0
      %656 = vmatprep.subr.bf16.mxu0 0
      %657 = vmatpush1.bf16.msra.mxu0 0
      %658 = vmatprep.subr.bf16.mxu0 0
      %659 = vmatpush1.bf16.msra.mxu0 0
      %660 = vmatprep.subr.bf16.mxu0 0
      %661 = vmatpush1.bf16.msra.mxu0 0
      %662 = vmatprep.subr.bf16.mxu0 0
      %663 = vmatpush1.bf16.msra.mxu0 0
      %664 = vmatprep.subr.bf16.mxu0 0
      %665 = vmatpush1.bf16.msra.mxu0 0
      %666 = vmatprep.subr.bf16.mxu0 0
      %667 = vmatpush1.bf16.msra.mxu0 0
      %668 = vmatprep.subr.bf16.mxu0 0
      %669 = vmatpush1.bf16.msra.mxu0 0
      %670 = vmatprep.subr.bf16.mxu0 0
      %671 = vmatpush1.bf16.msra.mxu0 0
      %672 = vmatprep.mubr.bf16.mxu0 0
      %673 = vmatmul.mubr.bf16.gmra.mrb[0].mxu0 %v634
      %v674 = vpop.f32.mrb[0].mxu0
      %v675 = vadd.f32 0.0, %v674
      %v676 = vpop.f32.mrb[0].mxu0
      %v677 = vpop.f32.mrb[0].mxu0
      %v678 = vpop.f32.mrb[0].mxu0
      %679 = vdwg.mxu0
      %v680 = vpack.c.bf16 %v585, %v585
      %v682 = vunpack.c.l.b16 %v299
      %v683 = vpack.c.b16 %v682, %v682
      %684 = vrot.lane.b32.xlu0 %v683, 96
      %v685 = vpop.permute.xlu0 %684
      %v687 = vsel %vm504, %v680, 0
      %v690 = vsel %vm636, %v685, 0
      %692 = vmatprep.subr.bf16.mxu0 0
      %693 = vmatpush1.bf16.msra.mxu0 %v690
      %694 = vmatprep.subr.bf16.mxu0 0
      %695 = vmatpush1.bf16.msra.mxu0 0
      %696 = vmatprep.subr.bf16.mxu0 0
      %697 = vmatpush1.bf16.msra.mxu0 0
      %698 = vmatprep.subr.bf16.mxu0 0
      %699 = vmatpush1.bf16.msra.mxu0 0
      %700 = vmatprep.subr.bf16.mxu0 0
      %701 = vmatpush1.bf16.msra.mxu0 0
      %702 = vmatprep.subr.bf16.mxu0 0
      %703 = vmatpush1.bf16.msra.mxu0 0
      %704 = vmatprep.subr.bf16.mxu0 0
      %705 = vmatpush1.bf16.msra.mxu0 0
      %706 = vmatprep.subr.bf16.mxu0 0
      %707 = vmatpush1.bf16.msra.mxu0 0
      %708 = vmatprep.subr.bf16.mxu0 0
      %709 = vmatpush1.bf16.msra.mxu0 0
      %710 = vmatprep.subr.bf16.mxu0 0
      %711 = vmatpush1.bf16.msra.mxu0 0
      %712 = vmatprep.subr.bf16.mxu0 0
      %713 = vmatpush1.bf16.msra.mxu0 0
      %714 = vmatprep.subr.bf16.mxu0 0
      %715 = vmatpush1.bf16.msra.mxu0 0
      %716 = vmatprep.subr.bf16.mxu0 0
      %717 = vmatpush1.bf16.msra.mxu0 0
      %718 = vmatprep.subr.bf16.mxu0 0
      %719 = vmatpush1.bf16.msra.mxu0 0
      %720 = vmatprep.subr.bf16.mxu0 0
      %721 = vmatpush1.bf16.msra.mxu0 0
      %722 = vmatprep.subr.bf16.mxu0 0
      %723 = vmatpush1.bf16.msra.mxu0 0
      %724 = vmatprep.mubr.bf16.mxu0 0
      %725 = vmatmul.mubr.bf16.gmra.mrb[0].mxu0 %v687
      %v726 = vpop.f32.mrb[0].mxu0
      %v727 = vadd.f32 0.0, %v726
      %v728 = vpop.f32.mrb[0].mxu0
      %v729 = vpop.f32.mrb[0].mxu0
      %v730 = vpop.f32.mrb[0].mxu0
      %731 = vdwg.mxu0
      %v732 = vpack.c.bf16 %v587, %v587
      %733 = vrot.lane.b32.xlu0 %v683, 64
      %v734 = vpop.permute.xlu0 %733
      %v736 = vsel %vm504, %v732, 0
      %v739 = vsel %vm636, %v734, 0
      %741 = vmatprep.subr.bf16.mxu0 0
      %742 = vmatpush1.bf16.msra.mxu0 %v739
      %743 = vmatprep.subr.bf16.mxu0 0
      %744 = vmatpush1.bf16.msra.mxu0 0
      %745 = vmatprep.subr.bf16.mxu0 0
      %746 = vmatpush1.bf16.msra.mxu0 0
      %747 = vmatprep.subr.bf16.mxu0 0
      %748 = vmatpush1.bf16.msra.mxu0 0
      %749 = vmatprep.subr.bf16.mxu0 0
      %750 = vmatpush1.bf16.msra.mxu0 0
      %751 = vmatprep.subr.bf16.mxu0 0
      %752 = vmatpush1.bf16.msra.mxu0 0
      %753 = vmatprep.subr.bf16.mxu0 0
      %754 = vmatpush1.bf16.msra.mxu0 0
      %755 = vmatprep.subr.bf16.mxu0 0
      %756 = vmatpush1.bf16.msra.mxu0 0
      %757 = vmatprep.subr.bf16.mxu0 0
      %758 = vmatpush1.bf16.msra.mxu0 0
      %759 = vmatprep.subr.bf16.mxu0 0
      %760 = vmatpush1.bf16.msra.mxu0 0
      %761 = vmatprep.subr.bf16.mxu0 0
      %762 = vmatpush1.bf16.msra.mxu0 0
      %763 = vmatprep.subr.bf16.mxu0 0
      %764 = vmatpush1.bf16.msra.mxu0 0
      %765 = vmatprep.subr.bf16.mxu0 0
      %766 = vmatpush1.bf16.msra.mxu0 0
      %767 = vmatprep.subr.bf16.mxu0 0
      %768 = vmatpush1.bf16.msra.mxu0 0
      %769 = vmatprep.subr.bf16.mxu0 0
      %770 = vmatpush1.bf16.msra.mxu0 0
      %771 = vmatprep.subr.bf16.mxu0 0
      %772 = vmatpush1.bf16.msra.mxu0 0
      %773 = vmatprep.mubr.bf16.mxu0 0
      %774 = vmatmul.mubr.bf16.gmra.mrb[0].mxu0 %v736
      %v775 = vpop.f32.mrb[0].mxu0
      %v776 = vadd.f32 0.0, %v775
      %v777 = vpop.f32.mrb[0].mxu0
      %v778 = vpop.f32.mrb[0].mxu0
      %v779 = vpop.f32.mrb[0].mxu0
      %780 = vdwg.mxu0
      %v781 = vpack.c.bf16 %v589, %v589
      %782 = vrot.lane.b32.xlu0 %v683, 32
      %v783 = vpop.permute.xlu0 %782
      %v785 = vsel %vm504, %v781, 0
      %v788 = vsel %vm636, %v783, 0
      %790 = vmatprep.subr.bf16.mxu0 0
      %791 = vmatpush1.bf16.msra.mxu0 %v788
      %792 = vmatprep.subr.bf16.mxu0 0
      %793 = vmatpush1.bf16.msra.mxu0 0
      %794 = vmatprep.subr.bf16.mxu0 0
      %795 = vmatpush1.bf16.msra.mxu0 0
      %796 = vmatprep.subr.bf16.mxu0 0
      %797 = vmatpush1.bf16.msra.mxu0 0
      %798 = vmatprep.subr.bf16.mxu0 0
      %799 = vmatpush1.bf16.msra.mxu0 0
      %800 = vmatprep.subr.bf16.mxu0 0
      %801 = vmatpush1.bf16.msra.mxu0 0
      %802 = vmatprep.subr.bf16.mxu0 0
      %803 = vmatpush1.bf16.msra.mxu0 0
      %804 = vmatprep.subr.bf16.mxu0 0
      %805 = vmatpush1.bf16.msra.mxu0 0
      %806 = vmatprep.subr.bf16.mxu0 0
      %807 = vmatpush1.bf16.msra.mxu0 0
      %808 = vmatprep.subr.bf16.mxu0 0
      %809 = vmatpush1.bf16.msra.mxu0 0
      %810 = vmatprep.subr.bf16.mxu0 0
      %811 = vmatpush1.bf16.msra.mxu0 0
      %812 = vmatprep.subr.bf16.mxu0 0
      %813 = vmatpush1.bf16.msra.mxu0 0
      %814 = vmatprep.subr.bf16.mxu0 0
      %815 = vmatpush1.bf16.msra.mxu0 0
      %816 = vmatprep.subr.bf16.mxu0 0
      %817 = vmatpush1.bf16.msra.mxu0 0
      %818 = vmatprep.subr.bf16.mxu0 0
      %819 = vmatpush1.bf16.msra.mxu0 0
      %820 = vmatprep.subr.bf16.mxu0 0
      %821 = vmatpush1.bf16.msra.mxu0 0
      %822 = vmatprep.mubr.bf16.mxu0 0
      %823 = vmatmul.mubr.bf16.gmra.mrb[0].mxu0 %v785
      %v824 = vpop.f32.mrb[0].mxu0
      %v825 = vadd.f32 0.0, %v824
      %v826 = vpop.f32.mrb[0].mxu0
      %v827 = vpop.f32.mrb[0].mxu0
      %v828 = vpop.f32.mrb[0].mxu0
      %829 = vdwg.mxu0
      %v830 = vlaneseq
      %v831 = vshrl.u32 %v830, 7
      %v832 = vsub.s32 0, %v831
      %v833 = vrot.slane %v549, %v832
      %835 = vbcast.lane.b32.xlu0 %v833, 256
      %v836 = vpop.permute.xlu0 %835
      %v837 = vlaneseq
      %v838 = vshrl.u32 %v837, 7
      %v839 = vsub.s32 1, %v838
      %v840 = vrot.slane %v549, %v839
      %842 = vbcast.lane.b32.xlu0 %v840, 256
      %v843 = vpop.permute.xlu0 %842
      %v844 = vlaneseq
      %v845 = vshrl.u32 %v844, 7
      %v846 = vsub.s32 2, %v845
      %v847 = vrot.slane %v549, %v846
      %849 = vbcast.lane.b32.xlu0 %v847, 256
      %v850 = vpop.permute.xlu0 %849
      %v851 = vlaneseq
      %v852 = vshrl.u32 %v851, 7
      %v853 = vsub.s32 3, %v852
      %v854 = vrot.slane %v549, %v853
      %856 = vbcast.lane.b32.xlu0 %v854, 256
      %v857 = vpop.permute.xlu0 %856
      %v858 = vld [vmem:[#allocation4] sm:$0xff]
      %v859 = vld [vmem:[#allocation4 + $0x8] sm:$0xff]
      %v860 = vld [vmem:[#allocation4 + $0x10] sm:$0xff]
      %v861 = vld [vmem:[#allocation4 + $0x18] sm:$0xff]
      %v862 = vmul.f32 %v836, %v858
      %v863 = vmul.f32 %v843, %v859
      %v864 = vmul.f32 %v850, %v860
      %v865 = vmul.f32 %v857, %v861
      %v866 = vadd.f32 %v862, %v675
      %v867 = vadd.f32 %v863, %v727
      %v868 = vadd.f32 %v864, %v776
      %v869 = vadd.f32 %v865, %v825
      %870 = vst.msk [vmem:[#allocation4] sm:$0xff] %vm300, %v866
      %871 = vst.msk [vmem:[#allocation4 + $0x8] sm:$0xff] %vm300, %v867
      %872 = vst.msk [vmem:[#allocation4 + $0x10] sm:$0xff] %vm300, %v868
      %873 = vst.msk [vmem:[#allocation4 + $0x18] sm:$0xff] %vm300, %v869
      // Predicated region
      $region37: #{causal_self_attention_forward.4} parent=31 // pred_check
        %p874 = pneg %p285
      $region38: #{causal_self_attention_forward.4} parent=31 // pred_check_branch
        %876 = sbr.rel (%p874) target = $region40
      $region39: #{causal_self_attention_forward.4} parent=31 // pred_region
        %v877 = vld [vmem:[#allocation3] sm:$0xf]
        %v878 = vrcp.pop %v877
        %v879 = vld [vmem:[#allocation4] sm:$0xff]
        %v880 = vld [vmem:[#allocation4 + $0x8] sm:$0xff]
        %v881 = vld [vmem:[#allocation4 + $0x10] sm:$0xff]
        %v882 = vld [vmem:[#allocation4 + $0x18] sm:$0xff]
        %v883 = vlaneseq
        %v884 = vshrl.u32 %v883, 7
        %v885 = vsub.s32 0, %v884
        %v886 = vrot.slane %v878, %v885
        %888 = vbcast.lane.b32.xlu0 %v886, 256
        %v889 = vpop.permute.xlu0 %888
        %v890 = vlaneseq
        %v891 = vshrl.u32 %v890, 7
        %v892 = vsub.s32 1, %v891
        %v893 = vrot.slane %v878, %v892
        %895 = vbcast.lane.b32.xlu0 %v893, 256
        %v896 = vpop.permute.xlu0 %895
        %v897 = vlaneseq
        %v898 = vshrl.u32 %v897, 7
        %v899 = vsub.s32 2, %v898
        %v900 = vrot.slane %v878, %v899
        %902 = vbcast.lane.b32.xlu0 %v900, 256
        %v903 = vpop.permute.xlu0 %902
        %v904 = vlaneseq
        %v905 = vshrl.u32 %v904, 7
        %v906 = vsub.s32 3, %v905
        %v907 = vrot.slane %v878, %v906
        %909 = vbcast.lane.b32.xlu0 %v907, 256
        %v910 = vpop.permute.xlu0 %909
        %v911 = vmul.f32 %v879, %v889
        %v912 = vmul.f32 %v880, %v896
        %v913 = vmul.f32 %v881, %v903
        %v914 = vmul.f32 %v882, %v910
        %916 = vrot.lane.b32.xlu0 %v912, 32
        %v917 = vpop.permute.xlu0 %916
        %920 = vrot.lane.b32.xlu0 %v913, 64
        %v921 = vpop.permute.xlu0 %920
        %924 = vrot.lane.b32.xlu0 %v914, 96
        %v925 = vpop.permute.xlu0 %924
        %v927 = vsel %vm300, %v911, %v917
        %vm928 = vcmask 523264
        %v929 = vsel %vm928, %v927, %v921
        %vm930 = vcmask 785408
        %v931 = vsel %vm930, %v929, %v925
        %v932 = vpack.c.bf16 %v931, %v931
        %933 = vst [vmem:[%s283] sm:$0xf] %v932
      $region40: #{causal_self_attention_forward.4} parent=31 // pred_fallthru
        _
      %p934 = scmp.lt.s32.totalorder %s19, 1
      %s935 = scalar_select %p934, %s19, 1
      %p936 = scmp.lt.s32.totalorder %s20, 0
      %s937 = scalar_select %p936, %s20, 0
      %s938 = sadd.s32 %s937, %s935
      %s939 = smul.addr %s938, 4
      %s940 = scalar_lea.vmem %s3, %s939
      // Predicated region
      $region41: #{causal_self_attention_forward.4} parent=31 // pred_check
        %p941 = pneg %p137
      $region42: #{causal_self_attention_forward.4} parent=31 // pred_check_branch
        %943 = sbr.rel (%p941) target = $region44
      $region43: #{causal_self_attention_forward.4} parent=31 // pred_region
        _
      $region44: #{causal_self_attention_forward.4} parent=31 // pred_fallthru
        _
    $region32: #{causal_self_attention_forward.4} parent=5 // pred_fallthru
      _
    %p944 = scmp.le.s32.totalorder 2, %s9
    // Predicated region
    $region45: #{causal_self_attention_forward.4} parent=5 // pred_check
      %p945 = pneg %p944
    $region46: #{causal_self_attention_forward.4} parent=5 // pred_check_branch
      %947 = sbr.rel (%p945) target = $region48
    $region47: #{causal_self_attention_forward.4} parent=5 // pred_region
      %s948 = ssub.s32 %s9, 2
      // Predicated region
      $region49: #{causal_self_attention_forward.4} parent=47 // pred_check
        %p949 = pneg %p143
      $region50: #{causal_self_attention_forward.4} parent=47 // pred_check_branch
        %951 = sbr.rel (%p949) target = $region52
      $region51: #{causal_self_attention_forward.4} parent=47 // pred_region
        %p952 = scmp.lt.s32.totalorder %s22, 1
        %s953 = scalar_select %p952, %s22, 1
        %p954 = scmp.lt.s32.totalorder %s23, 0
        %s955 = scalar_select %p954, %s23, 0
        %s956 = sadd.s32 %s955, %s953
        %s957 = smul.addr %s956, 4
        %s958 = scalar_lea.vmem %s3, %s957
      $region52: #{causal_self_attention_forward.4} parent=47 // pred_fallthru
        _
    $region48: #{causal_self_attention_forward.4} parent=5 // pred_fallthru
      _
  $region6: #{causal_self_attention_forward.4} parent=0 // loop_footer
    %s13 = sadd.s32 1, %s9
  $region7: #{causal_self_attention_forward.4} parent=0 // loop_footer_branch
    %8 = sbr.rel target = $region3
  $region8: #{causal_self_attention_forward.4} parent=0 // loop_exit
    _

</llo_original>
